<compile_context>
chip_gen: v6e
topology: v6e:2x2x1
jax: 0.10.0
libtpu: 0.0.40
codegen_flags: <defaults>
</compile_context>

<pallas_src>
import math

import jax
import jax.numpy as jnp
from jax.experimental import pallas as pl
from jax.experimental.pallas import tpu as pltpu

SIGMA = 25.0          # marginal_prob_std(t) = sqrt((sigma^(2t) - 1) / (2 ln sigma))
NEG_SLOPE = 0.01      # nn.LeakyReLU() default negative_slope
EMB_DIM = 16          # timestep embedding dim
HALF = EMB_DIM // 2   # 8

# Input slab layout (width 24): lanes 0..15 are trig scratch (zeros on input),
# lanes 16/17/18 = x / y / t, lanes 19..23 zero.
IN_W = 24
X_COL, Y_COL, T_COL = 16, 17, 18


def _leaky(v):
    # Exact LeakyReLU for 0 < slope < 1; one VALU op cheaper than where().
    return jnp.maximum(v, NEG_SLOPE * v)


def score_kernel(x_ref, c_ref, w1_ref, w2_ref, w3_ref, w4_ref, out_ref):
    x = x_ref[...]                              # (TB, 24) f32
    t = x[:, T_COL:T_COL + 1]                   # (TB, 1)

    # Constants slab (8, 128) f32.
    freqs = c_ref[0:1, 0:IN_W]                  # (1, 24) timestep freqs (duplicated for cos)
    phase = c_ref[1:2, 0:IN_W]                  # (1, 24) +pi/2 on the cos lanes
    b1 = c_ref[2:3, 0:48]                       # fused encoder layer-1 bias  [tb0 | xb0]
    b2 = c_ref[3:4, 0:96]                       # fused encoder layer-2 bias  [xb1 | tb1]
    b3 = c_ref[4:5, :]                          # net layer-0 bias (128)
    b4 = c_ref[5:6, :]                          # net layer-1 bias (128)
    w5 = c_ref[6:7, :]                          # final Linear(128,1) weight as a (1,128) row
    b5 = c_ref[7:8, 0:1]                        # final bias

    # u = [sin(t*f) | cos(t*f) | x | y | t | 0...]:
    # lanes 16.. get sin(0) = 0, so adding the slab puts x, y, t there; the t lane
    # multiplies a zero weight row in w1, so it contributes nothing.
    u = jnp.sin(t * freqs + phase) + x          # (TB, 24)

    def mm(a, w_ref):
        # Cast activations to the weight dtype (bf16 fast path on v6e/v7x);
        # always accumulate in f32 on the MXU.
        w = w_ref[...]
        return jnp.dot(a.astype(w.dtype), w, preferred_element_type=jnp.float32)

    h = _leaky(mm(u, w1_ref) + b1)              # (TB, 48)  [t_hidden | xy_hidden]
    h = _leaky(mm(h, w2_ref) + b2)              # (TB, 96)  [xy_emb | t_emb]
    h = _leaky(mm(h, w3_ref) + b3)              # (TB, 128) net layer 0
    h = _leaky(mm(h, w4_ref) + b4)              # (TB, 128) net layer 1

    # Final 128 -> 1 projection on VPU (broadcast mul) + XLU (lane reduce); no MXU pushes.
    out = jnp.sum(h * w5, axis=-1, keepdims=True) + b5      # (TB, 1)

    # Divide by marginal_prob_std(t) = sqrt((sigma^(2t) - 1) / (2 ln sigma)).
    log_sigma = math.log(SIGMA)
    var = (jnp.exp((2.0 * log_sigma) * t) - 1.0) * (0.5 / log_sigma)
    out_ref[...] = out * jax.lax.rsqrt(var)


# ----------------------------------------------------------------------------
# Parameter init (PyTorch-style Linear init, weights stored as [in, out]).
# ----------------------------------------------------------------------------
def init_linear(key, fan_in, fan_out):
    kw, kb = jax.random.split(key)
    bound = 1.0 / math.sqrt(fan_in)
    w = jax.random.uniform(kw, (fan_in, fan_out), jnp.float32, -bound, bound)
    b = jax.random.uniform(kb, (1, fan_out), jnp.float32, -bound, bound)
    return w, b


def init_params(seed=42):
    keys = jax.random.split(jax.random.PRNGKey(seed), 7)
    tw0, tb0 = init_linear(keys[0], 16, 16)     # t_encoder layer 0
    tw1, tb1 = init_linear(keys[1], 16, 32)     # t_encoder layer 1
    xw0, xb0 = init_linear(keys[2], 2, 32)      # xy_encoder layer 0
    xw1, xb1 = init_linear(keys[3], 32, 64)     # xy_encoder layer 1
    nw0, nb0 = init_linear(keys[4], 96, 128)    # net layer 0
    nw1, nb1 = init_linear(keys[5], 128, 128)   # net layer 1
    nw2, nb2 = init_linear(keys[6], 128, 1)     # net layer 2
    return dict(tw0=tw0, tb0=tb0, tw1=tw1, tb1=tb1,
                xw0=xw0, xb0=xb0, xw1=xw1, xb1=xb1,
                nw0=nw0, nb0=nb0, nw1=nw1, nb1=nb1, nw2=nw2, nb2=nb2)


def timestep_freqs():
    # exp(arange(half_dim) * -log(max_period)/(half_dim-1)), shape (HALF,)
    e = math.log(10000.0) / (HALF - 1)
    return jnp.exp(jnp.arange(HALF, dtype=jnp.float32) * -e)


# ----------------------------------------------------------------------------
# Fused / packed parameters
# ----------------------------------------------------------------------------
def fuse_params(p, use_bf16=True):
    wdt = jnp.bfloat16 if use_bf16 else jnp.float32

    # Encoder layer-1 block-diag (24, 48): rows 0:16 = tw0 (sin|cos inputs),
    # rows 16:18 = xw0 (x,y inputs), rows 18:24 (t lane + padding) = 0.
    w1 = jnp.zeros((IN_W, 48), jnp.float32)
    w1 = w1.at[0:16, 0:16].set(p["tw0"])
    w1 = w1.at[16:18, 16:48].set(p["xw0"])

    # Encoder layer-2 block-diag (48, 96), ordered so output = [xy_emb | t_emb].
    w2 = jnp.zeros((48, 96), jnp.float32)
    w2 = w2.at[0:16, 64:96].set(p["tw1"])
    w2 = w2.at[16:48, 0:64].set(p["xw1"])

    w3 = p["nw0"]                                # (96, 128)
    w4 = p["nw1"]                                # (128, 128)

    # Constants slab (8, 128) f32: freqs, phase, biases, final row/bias.
    freqs = timestep_freqs()
    freqs24 = jnp.zeros((IN_W,), jnp.float32).at[0:HALF].set(freqs).at[HALF:2 * HALF].set(freqs)
    phase24 = jnp.zeros((IN_W,), jnp.float32).at[HALF:2 * HALF].set(math.pi / 2.0)

    consts = jnp.zeros((8, 128), jnp.float32)
    consts = consts.at[0, 0:IN_W].set(freqs24)
    consts = consts.at[1, 0:IN_W].set(phase24)
    consts = consts.at[2, 0:48].set(jnp.concatenate([p["tb0"][0], p["xb0"][0]]))
    consts = consts.at[3, 0:96].set(jnp.concatenate([p["xb1"][0], p["tb1"][0]]))
    consts = consts.at[4, :].set(p["nb0"][0])
    consts = consts.at[5, :].set(p["nb1"][0])
    consts = consts.at[6, :].set(p["nw2"][:, 0])
    consts = consts.at[7, 0].set(p["nb2"][0, 0])

    return consts, w1.astype(wdt), w2.astype(wdt), w3.astype(wdt), w4.astype(wdt)


# ----------------------------------------------------------------------------
# Wrapper
# ----------------------------------------------------------------------------
def _cdiv(a, b):
    return (a + b - 1) // b


def _round_up(n, m):
    return ((n + m - 1) // m) * m


def _plan(batch, tb):
    """Pick (tile, padded_batch).  Multi-tile grids are kept even (v7x: 2 TCs)."""
    tb = _round_up(max(int(tb), 128), 128)
    if batch <= tb:
        tile = max(_round_up(batch, 128), 128)
        return tile, tile                          # single tile, minimal padding
    n_pairs = _cdiv(batch, 2 * tb)
    tile = min(tb, _round_up(_cdiv(batch, 2 * n_pairs), 128))
    return tile, 2 * n_pairs * tile


def cde_scorenet_2d(x, y, t, p, tb=1024, use_bf16=True):
    """Fused forward pass of cde_ScoreNet_2D.  x, y, t: (B, 1) f32 -> (B, 1) f32."""
    B = x.shape[0]
    tile, B_pad = _plan(B, tb)
    grid = B_pad // tile

    # Input slab (B_pad, 24): x, y, t at lanes 16/17/18, zero elsewhere.
    # Padded rows use t=1 so the rsqrt term stays finite (they are sliced off).
    xin = jnp.zeros((B_pad, IN_W), jnp.float32)
    xin = xin.at[:B, X_COL].set(x[:, 0].astype(jnp.float32))
    xin = xin.at[:B, Y_COL].set(y[:, 0].astype(jnp.float32))
    xin = xin.at[:B, T_COL].set(t[:, 0].astype(jnp.float32))
    if B_pad > B:
        xin = xin.at[B:, T_COL].set(1.0)

    consts, w1, w2, w3, w4 = fuse_params(p, use_bf16=use_bf16)
    weights = (w1, w2, w3, w4)

    def fixed_spec(a):
        return pl.BlockSpec(a.shape, lambda i: (0,) * a.ndim)

    in_specs = [pl.BlockSpec((tile, IN_W), lambda i: (i, 0)), fixed_spec(consts)]
    in_specs += [fixed_spec(w) for w in weights]
    out_specs = pl.BlockSpec((tile, 1), lambda i: (i, 0))

    # Advisory cost estimate (parameter bytes counted once; output is (B_pad, 1)).
    macs = sum(int(w.shape[0]) * int(w.shape[1]) for w in weights) + 128
    param_bytes = int(consts.size) * consts.dtype.itemsize + sum(
        int(w.size) * w.dtype.itemsize for w in weights)
    cost = pl.CostEstimate(
        flops=2 * B_pad * macs,
        transcendentals=B_pad * (IN_W + 2),            # sin x24, exp, rsqrt
        bytes_accessed=int(xin.size) * 4 + B_pad * 4 + param_bytes,
    )

    out_full = pl.pallas_call(
        score_kernel,
        out_shape=jax.ShapeDtypeStruct((B_pad, 1), jnp.float32),
        grid_spec=pltpu.PrefetchScalarGridSpec(
            num_scalar_prefetch=0,
            grid=(grid,),
            in_specs=in_specs,
            out_specs=out_specs,
        ),
        compiler_params=pltpu.CompilerParams(
            dimension_semantics=("parallel",),
            vmem_limit_bytes=16 * 1024 * 1024,
        ),
        cost_estimate=cost,
    )(xin, consts, *weights)

    return out_full[:B]


# ----------------------------------------------------------------------------
# Pure-JAX reference reproducing the PyTorch forward exactly.
# ----------------------------------------------------------------------------
def reference(x, y, t, p):
    xy = jnp.concatenate([x, y], axis=-1)
    emb = t * timestep_freqs()[None, :]
    t_in = jnp.concatenate([jnp.sin(emb), jnp.cos(emb)], axis=-1)

    def leaky(v):
        return jnp.where(v >= 0, v, NEG_SLOPE * v)

    h_t = leaky(t_in @ p["tw0"] + p["tb0"])
    t_emb = leaky(h_t @ p["tw1"] + p["tb1"])
    h_xy = leaky(xy @ p["xw0"] + p["xb0"])
    xy_emb = leaky(h_xy @ p["xw1"] + p["xb1"])
    h = jnp.concatenate([xy_emb, t_emb], axis=-1)
    h1 = leaky(h @ p["nw0"] + p["nb0"])
    h2 = leaky(h1 @ p["nw1"] + p["nb1"])
    out = h2 @ p["nw2"] + p["nb2"]
    log_sigma = math.log(SIGMA)
    std = jnp.sqrt((jnp.exp(2.0 * t * log_sigma) - 1.0) / (2.0 * log_sigma))
    return out / std


if __name__ == "__main__":
    params = init_params(seed=42)

    def make_inputs(seed, batch):
        kx, ky, kt = jax.random.split(jax.random.PRNGKey(seed), 3)
        return (jax.random.normal(kx, (batch, 1), jnp.float32),
                jax.random.normal(ky, (batch, 1), jnp.float32),
                jax.random.uniform(kt, (batch, 1), jnp.float32, minval=0.2, maxval=1.0))

    # Small deterministic inputs: x, y, t each (B, 1).
    B = 8
    x, y, t = make_inputs(0, B)

    # Strict f32 path.
    out = jax.block_until_ready(cde_scorenet_2d(x, y, t, params, use_bf16=False))
    ref = reference(x, y, t, params)
    assert out.shape == (B, 1)
    assert jnp.allclose(out, ref, rtol=1e-4, atol=1e-4), (
        f"f32 max abs err = {jnp.max(jnp.abs(out - ref))}")

    # Non-tile-multiple batch -> exercises padding (f32, strict).
    B2 = 300
    x2, y2, t2 = make_inputs(1, B2)
    out2 = jax.block_until_ready(cde_scorenet_2d(x2, y2, t2, params, use_bf16=False))
    ref2 = reference(x2, y2, t2, params)
    assert out2.shape == (B2, 1)
    assert jnp.allclose(out2, ref2, rtol=1e-4, atol=1e-4), (
        f"f32 padded-batch max abs err = {jnp.max(jnp.abs(out2 - ref2))}")

    # Default bf16 matmul-operand fast path (v6e/v7x MXU) -> relaxed tolerance.
    out_bf16 = jax.block_until_ready(cde_scorenet_2d(x, y, t, params))
    assert jnp.allclose(out_bf16, ref, rtol=3e-2, atol=3e-2), (
        f"bf16 max abs err = {jnp.max(jnp.abs(out_bf16 - ref))}")

    # Multi-tile (even) grid with the default tile size.
    B3 = 2048
    x3, y3, t3 = make_inputs(2, B3)
    out3 = jax.block_until_ready(cde_scorenet_2d(x3, y3, t3, params))
    ref3 = reference(x3, y3, t3, params)
    assert out3.shape == (B3, 1)
    assert jnp.allclose(out3, ref3, rtol=3e-2, atol=3e-2), (
        f"bf16 multi-tile max abs err = {jnp.max(jnp.abs(out3 - ref3))}")

    print("KERNEL_OK")
</pallas_src>

<mosaic_0001>
module attributes {stable_mosaic.version = 11 : i64} {
  func.func @score_kernel(%arg0: i32, %arg1: memref<128x24xf32, #tpu.memory_space<vmem>>, %arg2: memref<8x128xf32, #tpu.memory_space<vmem>>, %arg3: memref<24x48xf32, #tpu.memory_space<vmem>>, %arg4: memref<48x96xf32, #tpu.memory_space<vmem>>, %arg5: memref<96x128xf32, #tpu.memory_space<vmem>>, %arg6: memref<128x128xf32, #tpu.memory_space<vmem>>, %arg7: memref<128x1xf32, #tpu.memory_space<vmem>>) attributes {dimension_semantics = [#tpu.dimension_semantics<parallel>], iteration_bounds = array<i64: 1>, scalar_prefetch = 0 : i64, scratch_operands = 0 : i64, tpu.core_type = #tpu.core_type<tc>, window_params = [{transform_indices = @transform_0, window_bounds = array<i64: 128, 24>}, {pipeline_mode = #tpu.pipeline_mode<synchronous>, transform_indices = @transform_1, window_bounds = array<i64: 8, 128>}, {pipeline_mode = #tpu.pipeline_mode<synchronous>, transform_indices = @transform_2, window_bounds = array<i64: 24, 48>}, {pipeline_mode = #tpu.pipeline_mode<synchronous>, transform_indices = @transform_3, window_bounds = array<i64: 48, 96>}, {pipeline_mode = #tpu.pipeline_mode<synchronous>, transform_indices = @transform_4, window_bounds = array<i64: 96, 128>}, {pipeline_mode = #tpu.pipeline_mode<synchronous>, transform_indices = @transform_5, window_bounds = array<i64: 128, 128>}, {transform_indices = @transform_6, window_bounds = array<i64: 128, 1>}]} {
    %c0 = arith.constant 0 : index
    %c0_0 = arith.constant 0 : index
    %0 = vector.load %arg1[%c0, %c0_0] : memref<128x24xf32, #tpu.memory_space<vmem>>, vector<128x24xf32>
    %1 = vector.extract_strided_slice %0 {offsets = [0, 18], sizes = [128, 1], strides = [1, 1]} : vector<128x24xf32> to vector<128x1xf32>
    %c0_1 = arith.constant 0 : index
    %c0_2 = arith.constant 0 : index
    %2 = vector.load %arg2[%c0_1, %c0_2] : memref<8x128xf32, #tpu.memory_space<vmem>>, vector<1x24xf32>
    %c1 = arith.constant 1 : index
    %c0_3 = arith.constant 0 : index
    %3 = vector.load %arg2[%c1, %c0_3] : memref<8x128xf32, #tpu.memory_space<vmem>>, vector<1x24xf32>
    %c2 = arith.constant 2 : index
    %c0_4 = arith.constant 0 : index
    %4 = vector.load %arg2[%c2, %c0_4] : memref<8x128xf32, #tpu.memory_space<vmem>>, vector<1x48xf32>
    %c3 = arith.constant 3 : index
    %c0_5 = arith.constant 0 : index
    %5 = vector.load %arg2[%c3, %c0_5] : memref<8x128xf32, #tpu.memory_space<vmem>>, vector<1x96xf32>
    %c4 = arith.constant 4 : index
    %c0_6 = arith.constant 0 : index
    %6 = vector.load %arg2[%c4, %c0_6] : memref<8x128xf32, #tpu.memory_space<vmem>>, vector<1x128xf32>
    %c5 = arith.constant 5 : index
    %c0_7 = arith.constant 0 : index
    %7 = vector.load %arg2[%c5, %c0_7] : memref<8x128xf32, #tpu.memory_space<vmem>>, vector<1x128xf32>
    %c6 = arith.constant 6 : index
    %c0_8 = arith.constant 0 : index
    %8 = vector.load %arg2[%c6, %c0_8] : memref<8x128xf32, #tpu.memory_space<vmem>>, vector<1x128xf32>
    %c7 = arith.constant 7 : index
    %c0_9 = arith.constant 0 : index
    %9 = vector.load %arg2[%c7, %c0_9] : memref<8x128xf32, #tpu.memory_space<vmem>>, vector<1x1xf32>
    %10 = vector.broadcast %1 : vector<128x1xf32> to vector<128x24xf32>
    %11 = vector.broadcast %2 : vector<1x24xf32> to vector<128x24xf32>
    %12 = arith.mulf %10, %11 : vector<128x24xf32>
    %13 = vector.broadcast %3 : vector<1x24xf32> to vector<128x24xf32>
    %14 = arith.addf %12, %13 : vector<128x24xf32>
    %15 = math.sin %14 : vector<128x24xf32>
    %16 = arith.addf %15, %0 : vector<128x24xf32>
    %c0_10 = arith.constant 0 : index
    %c0_11 = arith.constant 0 : index
    %17 = vector.load %arg3[%c0_10, %c0_11] : memref<24x48xf32, #tpu.memory_space<vmem>>, vector<24x48xf32>
    %cst = arith.constant dense<0.000000e+00> : vector<128x48xf32>
    %18 = tpu.matmul %16, %17, %cst {dimension_numbers = #tpu.dot_dimension_numbers<[1], [0], [0], [1], [0, 0, 1, 1], [], []>} : vector<128x24xf32>, vector<24x48xf32>, vector<128x48xf32> -> vector<128x48xf32>
    %19 = vector.broadcast %4 : vector<1x48xf32> to vector<128x48xf32>
    %20 = arith.addf %18, %19 : vector<128x48xf32>
    %cst_12 = arith.constant 0.00999999977 : f32
    %21 = vector.broadcast %cst_12 : f32 to vector<128x48xf32>
    %22 = arith.mulf %21, %20 : vector<128x48xf32>
    %23 = arith.maximumf %20, %22 : vector<128x48xf32>
    %c0_13 = arith.constant 0 : index
    %c0_14 = arith.constant 0 : index
    %24 = vector.load %arg4[%c0_13, %c0_14] : memref<48x96xf32, #tpu.memory_space<vmem>>, vector<48x96xf32>
    %cst_15 = arith.constant dense<0.000000e+00> : vector<128x96xf32>
    %25 = tpu.matmul %23, %24, %cst_15 {dimension_numbers = #tpu.dot_dimension_numbers<[1], [0], [0], [1], [0, 0, 1, 1], [], []>} : vector<128x48xf32>, vector<48x96xf32>, vector<128x96xf32> -> vector<128x96xf32>
    %26 = vector.broadcast %5 : vector<1x96xf32> to vector<128x96xf32>
    %27 = arith.addf %25, %26 : vector<128x96xf32>
    %cst_16 = arith.constant 0.00999999977 : f32
    %28 = vector.broadcast %cst_16 : f32 to vector<128x96xf32>
    %29 = arith.mulf %28, %27 : vector<128x96xf32>
    %30 = arith.maximumf %27, %29 : vector<128x96xf32>
    %c0_17 = arith.constant 0 : index
    %c0_18 = arith.constant 0 : index
    %31 = vector.load %arg5[%c0_17, %c0_18] : memref<96x128xf32, #tpu.memory_space<vmem>>, vector<96x128xf32>
    %cst_19 = arith.constant dense<0.000000e+00> : vector<128x128xf32>
    %32 = tpu.matmul %30, %31, %cst_19 {dimension_numbers = #tpu.dot_dimension_numbers<[1], [0], [0], [1], [0, 0, 1, 1], [], []>} : vector<128x96xf32>, vector<96x128xf32>, vector<128x128xf32> -> vector<128x128xf32>
    %33 = vector.broadcast %6 : vector<1x128xf32> to vector<128x128xf32>
    %34 = arith.addf %32, %33 : vector<128x128xf32>
    %cst_20 = arith.constant 0.00999999977 : f32
    %35 = vector.broadcast %cst_20 : f32 to vector<128x128xf32>
    %36 = arith.mulf %35, %34 : vector<128x128xf32>
    %37 = arith.maximumf %34, %36 : vector<128x128xf32>
    %c0_21 = arith.constant 0 : index
    %c0_22 = arith.constant 0 : index
    %38 = vector.load %arg6[%c0_21, %c0_22] : memref<128x128xf32, #tpu.memory_space<vmem>>, vector<128x128xf32>
    %cst_23 = arith.constant dense<0.000000e+00> : vector<128x128xf32>
    %39 = tpu.matmul %37, %38, %cst_23 {dimension_numbers = #tpu.dot_dimension_numbers<[1], [0], [0], [1], [0, 0, 1, 1], [], []>} : vector<128x128xf32>, vector<128x128xf32>, vector<128x128xf32> -> vector<128x128xf32>
    %40 = vector.broadcast %7 : vector<1x128xf32> to vector<128x128xf32>
    %41 = arith.addf %39, %40 : vector<128x128xf32>
    %cst_24 = arith.constant 0.00999999977 : f32
    %42 = vector.broadcast %cst_24 : f32 to vector<128x128xf32>
    %43 = arith.mulf %42, %41 : vector<128x128xf32>
    %44 = arith.maximumf %41, %43 : vector<128x128xf32>
    %45 = vector.broadcast %8 : vector<1x128xf32> to vector<128x128xf32>
    %46 = arith.mulf %44, %45 : vector<128x128xf32>
    %cst_25 = arith.constant dense<0.000000e+00> : vector<128xf32>
    %47 = vector.multi_reduction <add>, %46, %cst_25 [1] : vector<128x128xf32> to vector<128xf32>
    %48 = vector.shape_cast %47 : vector<128xf32> to vector<128x1xf32>
    %49 = vector.broadcast %9 : vector<1x1xf32> to vector<128x1xf32>
    %50 = arith.addf %48, %49 : vector<128x1xf32>
    %cst_26 = arith.constant 6.43775177 : f32
    %51 = vector.broadcast %cst_26 : f32 to vector<128x1xf32>
    %52 = arith.mulf %51, %1 : vector<128x1xf32>
    %53 = math.exp %52 : vector<128x1xf32>
    %cst_27 = arith.constant 1.000000e+00 : f32
    %54 = vector.broadcast %cst_27 : f32 to vector<128x1xf32>
    %55 = arith.subf %53, %54 : vector<128x1xf32>
    %cst_28 = arith.constant 0.155333728 : f32
    %56 = vector.broadcast %cst_28 : f32 to vector<128x1xf32>
    %57 = arith.mulf %55, %56 : vector<128x1xf32>
    %58 = math.rsqrt %57 : vector<128x1xf32>
    %59 = arith.mulf %50, %58 : vector<128x1xf32>
    %c0_29 = arith.constant 0 : index
    %c0_30 = arith.constant 0 : index
    %60 = vector.load %arg7[%c0_29, %c0_30] : memref<128x1xf32, #tpu.memory_space<vmem>>, vector<128x1xf32>
    tpu.vector_store %arg7[%c0_29, %c0_30], %59 {strides = array<i32>} : memref<128x1xf32, #tpu.memory_space<vmem>>, vector<128x1xf32>,
    return
  }
  func.func @transform_0(%arg0: i32) -> (i32, i32) {
    %c0_i32 = arith.constant 0 : i32
    %c0_i32_0 = arith.constant 0 : i32
    return %arg0, %c0_i32 : i32, i32
  }
  func.func @transform_1(%arg0: i32) -> (i32, i32) {
    %c0_i32 = arith.constant 0 : i32
    %c0_i32_0 = arith.constant 0 : i32
    %c0_i32_1 = arith.constant 0 : i32
    return %c0_i32, %c0_i32_0 : i32, i32
  }
  func.func @transform_2(%arg0: i32) -> (i32, i32) {
    %c0_i32 = arith.constant 0 : i32
    %c0_i32_0 = arith.constant 0 : i32
    %c0_i32_1 = arith.constant 0 : i32
    return %c0_i32, %c0_i32_0 : i32, i32
  }
  func.func @transform_3(%arg0: i32) -> (i32, i32) {
    %c0_i32 = arith.constant 0 : i32
    %c0_i32_0 = arith.constant 0 : i32
    %c0_i32_1 = arith.constant 0 : i32
    return %c0_i32, %c0_i32_0 : i32, i32
  }
  func.func @transform_4(%arg0: i32) -> (i32, i32) {
    %c0_i32 = arith.constant 0 : i32
    %c0_i32_0 = arith.constant 0 : i32
    %c0_i32_1 = arith.constant 0 : i32
    return %c0_i32, %c0_i32_0 : i32, i32
  }
  func.func @transform_5(%arg0: i32) -> (i32, i32) {
    %c0_i32 = arith.constant 0 : i32
    %c0_i32_0 = arith.constant 0 : i32
    %c0_i32_1 = arith.constant 0 : i32
    return %c0_i32, %c0_i32_0 : i32, i32
  }
  func.func @transform_6(%arg0: i32) -> (i32, i32) {
    %c0_i32 = arith.constant 0 : i32
    %c0_i32_0 = arith.constant 0 : i32
    return %arg0, %c0_i32 : i32, i32
  }
}

</mosaic_0001>

<llo_original>
// kernel: tpu_custom_call.1
$region0: #{tpu_custom_call.1}
  #allocation0 [shape = 'u32[]', space=smem, size = 0x4, offset = 0x4, fixed_abs, tag = 'smem constant byte address 0x4 - core index']
  #allocation1 [shape = 'u32[144,128]{1,0:T(1,128)}', space=vmem, size = 0x12000, scoped, tag = 'internal scratch']
  %s0 = inlined_call_operand.vmem [shape: f32[128,24], index: 0, kind: input, shape index: {}]
  %s1 = inlined_call_operand.vmem [shape: f32[8,128], index: 1, kind: input, shape index: {}]
  %s2 = inlined_call_operand.vmem [shape: f32[24,48], index: 2, kind: input, shape index: {}]
  %s3 = inlined_call_operand.hbm [shape: f32[48,96], index: 3, kind: input, shape index: {}]
  %s4 = inlined_call_operand.hbm [shape: f32[96,128], index: 4, kind: input, shape index: {}]
  %s5 = inlined_call_operand.vmem [shape: f32[128,128], index: 5, kind: input, shape index: {}]
  %s6 = inlined_call_operand.vmem [shape: f32[128,1], index: 6, kind: output, shape index: {}]
  %s7 = sld [smem:[#allocation0]]
  $region42: #{tpu_custom_call.1} parent=0
    _
  %s9 = ssub.s32 1, %s7
  %s10 = scalar_select 0, %s9, %s7
  $region1: #{tpu_custom_call.1} parent=0
    #allocation2 [shape = 'u8[24576]{0}', space=vmem, size = 0x6000, scoped, tag = 'input window, operand 3, single buffered']
    #allocation3 [shape = 's32[1]{0}', space=sflag, size = 0x4, scoped, tag = 'scoped memory for tpu_custom_call.1']
    #allocation4 [shape = 'u8[49152]{0}', space=vmem, size = 0xc000, scoped, tag = 'input window, operand 4, single buffered']
    #allocation5 [shape = 's32[1]{0}', space=sflag, size = 0x4, scoped, tag = 'scoped memory for tpu_custom_call.1']
    %11 = vsyncpa [#allocation3], 0
    %12 = vsyncpa [#allocation5], 0
    // Predicated region
    $region2: #{tpu_custom_call.1} parent=1 // pred_check
      _
    $region3: #{tpu_custom_call.1} parent=1 // pred_check_branch
      %14 = sbr.rel (0) target = $region5
    $region4: #{tpu_custom_call.1} parent=1 // pred_region
      _
    $region5: #{tpu_custom_call.1} parent=1 // pred_fallthru
      _
    // Predicated region
    $region6: #{tpu_custom_call.1} parent=1 // pred_check
      _
    $region7: #{tpu_custom_call.1} parent=1 // pred_check_branch
      %16 = sbr.rel (0) target = $region9
    $region8: #{tpu_custom_call.1} parent=1 // pred_region
      _
    $region9: #{tpu_custom_call.1} parent=1 // pred_fallthru
      _
    // Predicated region
    $region10: #{tpu_custom_call.1} parent=1 // pred_check
      _
    $region11: #{tpu_custom_call.1} parent=1 // pred_check_branch
      %18 = sbr.rel (0) target = $region13
    $region12: #{tpu_custom_call.1} parent=1 // pred_region
      _
    $region13: #{tpu_custom_call.1} parent=1 // pred_fallthru
      _
    // Predicated region
    $region14: #{tpu_custom_call.1} parent=1 // pred_check
      _
    $region15: #{tpu_custom_call.1} parent=1 // pred_check_branch
      %20 = sbr.rel (0) target = $region17
    $region16: #{tpu_custom_call.1} parent=1 // pred_region
      %s22 = ssub.s32 768, 768
      %23 = vsyncadd [#allocation3], %s22
      %s24 = sshll.u32 [#allocation2], 4
      %s25 = int_to_ptr.vmem [resolvable:$true] %s24
      %30 = dma.hbm_to_vmem [thread:$0]  %s3, 768, %s25, [#allocation3], 128, 128, 8
    $region17: #{tpu_custom_call.1} parent=1 // pred_fallthru
      _
    // Predicated region
    $region18: #{tpu_custom_call.1} parent=1 // pred_check
      _
    $region19: #{tpu_custom_call.1} parent=1 // pred_check_branch
      %32 = sbr.rel (0) target = $region21
    $region20: #{tpu_custom_call.1} parent=1 // pred_region
      %s34 = ssub.s32 1536, 1536
      %35 = vsyncadd [#allocation5], %s34
      %s36 = sshll.u32 [#allocation4], 4
      %s37 = int_to_ptr.vmem [resolvable:$true] %s36
      %42 = dma.hbm_to_vmem [thread:$0]  %s4, 1536, %s37, [#allocation5], 128, 128, 8
    $region21: #{tpu_custom_call.1} parent=1 // pred_fallthru
      _
    // Predicated region
    $region22: #{tpu_custom_call.1} parent=1 // pred_check
      _
    $region23: #{tpu_custom_call.1} parent=1 // pred_check_branch
      %44 = sbr.rel (0) target = $region25
    $region24: #{tpu_custom_call.1} parent=1 // pred_region
      _
    $region25: #{tpu_custom_call.1} parent=1 // pred_fallthru
      _
    // Predicated region
    $region26: #{tpu_custom_call.1} parent=1 // pred_check
      _
    $region27: #{tpu_custom_call.1} parent=1 // pred_check_branch
      %46 = sbr.rel (0) target = $region29
    $region28: #{tpu_custom_call.1} parent=1 // pred_region
      %47 = dma.done [#allocation3], 768
    $region29: #{tpu_custom_call.1} parent=1 // pred_fallthru
      _
    // Predicated region
    $region30: #{tpu_custom_call.1} parent=1 // pred_check
      _
    $region31: #{tpu_custom_call.1} parent=1 // pred_check_branch
      %49 = sbr.rel (0) target = $region33
    $region32: #{tpu_custom_call.1} parent=1 // pred_region
      %50 = dma.done [#allocation5], 1536
    $region33: #{tpu_custom_call.1} parent=1 // pred_fallthru
      _
    %v51 = vld [vmem:[%s0] sm:$0xff]
    %v52 = vld [vmem:[%s0 + $0x8] sm:$0xff]
    %v53 = vld [vmem:[%s0 + $0x10] sm:$0xff]
    %v54 = vld [vmem:[%s0 + $0x18] sm:$0xff]
    %v55 = vld [vmem:[%s0 + $0x20] sm:$0xff]
    %v56 = vld [vmem:[%s0 + $0x28] sm:$0xff]
    %v57 = vld [vmem:[%s0 + $0x30] sm:$0xff]
    %v58 = vld [vmem:[%s0 + $0x38] sm:$0xff]
    %v59 = vld [vmem:[%s0 + $0x40] sm:$0xff]
    %v60 = vld [vmem:[%s0 + $0x48] sm:$0xff]
    %v61 = vld [vmem:[%s0 + $0x50] sm:$0xff]
    %v62 = vld [vmem:[%s0 + $0x58] sm:$0xff]
    %v63 = vld [vmem:[%s0 + $0x60] sm:$0xff]
    %v64 = vld [vmem:[%s0 + $0x68] sm:$0xff]
    %v65 = vld [vmem:[%s0 + $0x70] sm:$0xff]
    %v66 = vld [vmem:[%s0 + $0x78] sm:$0xff]
    %v67 = vld [vmem:[%s1] sm:$0x1]
    %v68 = vld [vmem:[%s1 + $0x1] sm:$0x1]
    %v69 = vld [vmem:[%s1 + $0x2] sm:$0x1]
    %v70 = vld [vmem:[%s1 + $0x3] sm:$0x1]
    %v71 = vld [vmem:[%s1 + $0x4] sm:$0x1]
    %v72 = vld [vmem:[%s1 + $0x5] sm:$0x1]
    %v73 = vld [vmem:[%s1 + $0x6] sm:$0x1]
    %v74 = vld [vmem:[%s1 + $0x7] sm:$0x1]
    %76 = vset.pattern.permute.xlu0 18
    %77 = vperm.xlu0 %76, %v51
    %v78 = vpop.permute.xlu0 %77
    %81 = vset.pattern.permute.xlu0 18
    %82 = vperm.xlu0 %81, %v52
    %v83 = vpop.permute.xlu0 %82
    %86 = vset.pattern.permute.xlu0 18
    %87 = vperm.xlu0 %86, %v53
    %v88 = vpop.permute.xlu0 %87
    %91 = vset.pattern.permute.xlu0 18
    %92 = vperm.xlu0 %91, %v54
    %v93 = vpop.permute.xlu0 %92
    %96 = vset.pattern.permute.xlu0 18
    %97 = vperm.xlu0 %96, %v55
    %v98 = vpop.permute.xlu0 %97
    %101 = vset.pattern.permute.xlu0 18
    %102 = vperm.xlu0 %101, %v56
    %v103 = vpop.permute.xlu0 %102
    %106 = vset.pattern.permute.xlu0 18
    %107 = vperm.xlu0 %106, %v57
    %v108 = vpop.permute.xlu0 %107
    %111 = vset.pattern.permute.xlu0 18
    %112 = vperm.xlu0 %111, %v58
    %v113 = vpop.permute.xlu0 %112
    %116 = vset.pattern.permute.xlu0 18
    %117 = vperm.xlu0 %116, %v59
    %v118 = vpop.permute.xlu0 %117
    %121 = vset.pattern.permute.xlu0 18
    %122 = vperm.xlu0 %121, %v60
    %v123 = vpop.permute.xlu0 %122
    %126 = vset.pattern.permute.xlu0 18
    %127 = vperm.xlu0 %126, %v61
    %v128 = vpop.permute.xlu0 %127
    %131 = vset.pattern.permute.xlu0 18
    %132 = vperm.xlu0 %131, %v62
    %v133 = vpop.permute.xlu0 %132
    %136 = vset.pattern.permute.xlu0 18
    %137 = vperm.xlu0 %136, %v63
    %v138 = vpop.permute.xlu0 %137
    %141 = vset.pattern.permute.xlu0 18
    %142 = vperm.xlu0 %141, %v64
    %v143 = vpop.permute.xlu0 %142
    %146 = vset.pattern.permute.xlu0 18
    %147 = vperm.xlu0 %146, %v65
    %v148 = vpop.permute.xlu0 %147
    %151 = vset.pattern.permute.xlu0 18
    %152 = vperm.xlu0 %151, %v66
    %v153 = vpop.permute.xlu0 %152
    %v155 = vlaneseq
    %v156 = vshrl.u32 %v155, 7
    %v157 = vsub.s32 0, %v156
    %v158 = vrot.slane %v67, %v157
    %v159 = vmul.f32 %v78, %v158
    %v160 = vmul.f32 %v83, %v158
    %v161 = vmul.f32 %v88, %v158
    %v162 = vmul.f32 %v93, %v158
    %v163 = vmul.f32 %v98, %v158
    %v164 = vmul.f32 %v103, %v158
    %v165 = vmul.f32 %v108, %v158
    %v166 = vmul.f32 %v113, %v158
    %v167 = vmul.f32 %v118, %v158
    %v168 = vmul.f32 %v123, %v158
    %v169 = vmul.f32 %v128, %v158
    %v170 = vmul.f32 %v133, %v158
    %v171 = vmul.f32 %v138, %v158
    %v172 = vmul.f32 %v143, %v158
    %v173 = vmul.f32 %v148, %v158
    %v174 = vmul.f32 %v153, %v158
    %v175 = vlaneseq
    %v176 = vshrl.u32 %v175, 7
    %v177 = vsub.s32 0, %v176
    %v178 = vrot.slane %v68, %v177
    %v179 = vadd.f32 %v159, %v178
    %v180 = vadd.f32 %v160, %v178
    %v181 = vadd.f32 %v161, %v178
    %v182 = vadd.f32 %v162, %v178
    %v183 = vadd.f32 %v163, %v178
    %v184 = vadd.f32 %v164, %v178
    %v185 = vadd.f32 %v165, %v178
    %v186 = vadd.f32 %v166, %v178
    %v187 = vadd.f32 %v167, %v178
    %v188 = vadd.f32 %v168, %v178
    %v189 = vadd.f32 %v169, %v178
    %v190 = vadd.f32 %v170, %v178
    %v191 = vadd.f32 %v171, %v178
    %v192 = vadd.f32 %v172, %v178
    %v193 = vadd.f32 %v173, %v178
    %v194 = vadd.f32 %v174, %v178
    %v195 = vand.u32 2147483647, %v179
    %vm196 = vcmp.le.f32.partialorder %v195, 0.7853982
    %vm197 = vcmp.lt.s32.totalorder %v179, 0
    %v198 = vand.u32 %v179, 2139095040
    %v199 = vshrl.u32 %v198, 23
    %v200 = vsub.s32 %v199, 127
    %v201 = vand.u32 2147483647, %v179
    %v202 = vand.u32 %v201, 8388607
    %v203 = vor.u32 %v202, 8388608
    %v204 = vsub.s32 0, %v203
    %v205 = vadd.s32 %v200, 1
    %vm206 = vcmp.gt.s32.totalorder %v205, 0
    %v207 = vsel %vm206, %v205, 0
    %v208 = vshrl.u32 %v207, 5
    %v209 = vand.u32 %v207, 31
    %v210 = vsub.s32 32, %v209
    %v211 = vshrl.u32 683565275, %v210
    %v212 = vshll.u32 683565275, %v209
    %v213 = vshrl.u32 2475754826, %v210
    %v214 = vor.u32 %v212, %v213
    %v215 = vshll.u32 2475754826, %v209
    %v216 = vshrl.u32 2131351028, %v210
    %v217 = vor.u32 %v215, %v216
    %v218 = vshll.u32 2131351028, %v209
    %v219 = vshrl.u32 2102212464, %v210
    %v220 = vor.u32 %v218, %v219
    %v221 = vshll.u32 2102212464, %v209
    %v222 = vshrl.u32 920167782, %v210
    %v223 = vor.u32 %v221, %v222
    %v224 = vshll.u32 920167782, %v209
    %v225 = vshrl.u32 1326507024, %v210
    %v226 = vor.u32 %v224, %v225
    %vm227 = vcmp.lt.s32.totalorder %v208, 1
    %vm228 = vcmp.lt.s32.totalorder %v208, 2
    %vm229 = vcmp.lt.s32.totalorder %v208, 3
    %vm230 = vcmp.lt.s32.totalorder %v208, 4
    %v231 = vsel %vm227, %v211, %v214
    %v232 = vsel %vm230, %v220, 2102212464
    %v233 = vsel %vm229, %v217, %v232
    %v234 = vsel %vm228, %v231, %v233
    %v235 = vsel %vm227, %v214, %v217
    %v236 = vsel %vm230, %v223, 920167782
    %v237 = vsel %vm229, %v220, %v236
    %v238 = vsel %vm228, %v235, %v237
    %v239 = vsel %vm227, %v217, %v220
    %v240 = vsel %vm230, %v226, 1326507024
    %v241 = vsel %vm229, %v223, %v240
    %v242 = vsel %vm228, %v239, %v241
    %v243 = vshll.u32 %v203, 8
    %v244 = vmul.u32.u64.compose %v243, %v242
    %v245 = vextract.low.u32 %v244
    %v246 = vextract.high.u32 %v244
    %v247 = vmul.u32.u64.compose %v243, %v238
    %v248 = vextract.low.u32 %v247
    %v249 = vextract.high.u32 %v247
    %v250 = vmul.u32 %v243, %v234
    %v251 = vadd.s32 %v246, %v248
    %vm252 = vc.u32 %v246, %v248
    %v253 = vadd.s32 %v249, 1
    %v254 = vsel %vm252, %v253, %v249
    %v255 = vadd.s32 %v250, %v254
    %v256 = vadd.s32 %v255, 536870912
    %v257 = vshrl.u32 %v256, 30
    %v258 = vshll.u32 %v257, 30
    %v259 = vsub.s32 %v255, %v258
    %vm260 = vcmp.lt.s32.totalorder %v259, 0
    %v261 = vsub.s32 0, %v259
    %v262 = vsel %vm260, %v261, %v259
    %v263 = vclz %v262
    %v264 = vsub.s32 %v263, 2
    %vm265 = vcmp.gt.s32.totalorder 0, %v264
    %v266 = vsel %vm265, 0, %v264
    %v267 = vsub.s32 32, %v266
    %v268 = vshll.u32 %v259, %v266
    %v269 = vshrl.u32 %v251, %v267
    %v270 = vor.u32 %v268, %v269
    %v271 = vsub.s32 4294967266, %v266
    %v272 = vadd.s32 %v271, 127
    %v273 = vshll.u32 %v272, 23
    %v274 = vor.u32 4788187, %v273
    %v275 = vand.u32 2147483647, %v274
    %v277 = vcvt.s32.f32 %v270
    %v278 = vmul.f32 %v277, %v275
    %v279 = vxor.u32 %v278, 2147483648
    %v280 = vsel %vm197, %v279, %v278
    %v281 = vsub.s32 4, %v257
    %v282 = vsel %vm197, %v281, %v257
    %v283 = vsel %vm196, %v179, %v280
    %v284 = vsel %vm196, 0, %v282
    %v285 = vcosq.f32.pop %v283
    %v286 = vsinq.f32.pop %v283
    %vm287 = vweird.f32 %v179
    %v288 = vadd.s32 %v284, 3
    %v289 = vand.u32 %v288, 3
    %vm290 = vcmp.lt.s32.totalorder %v289, 2
    %vm291 = vcmp.eq.s32.totalorder %v289, 0
    %v292 = vxor.u32 %v286, 2147483648
    %v293 = vsel %vm291, %v285, %v292
    %vm294 = vcmp.eq.s32.totalorder %v289, 2
    %v295 = vxor.u32 %v285, 2147483648
    %v296 = vsel %vm294, %v295, %v286
    %v297 = vsel %vm290, %v293, %v296
    %v298 = vsel %vm287, nan, %v297
    %v299 = vand.u32 2147483647, %v180
    %vm300 = vcmp.le.f32.partialorder %v299, 0.7853982
    %vm301 = vcmp.lt.s32.totalorder %v180, 0
    %v302 = vand.u32 %v180, 2139095040
    %v303 = vshrl.u32 %v302, 23
    %v304 = vsub.s32 %v303, 127
    %v305 = vand.u32 2147483647, %v180
    %v306 = vand.u32 %v305, 8388607
    %v307 = vor.u32 %v306, 8388608
    %v308 = vsub.s32 0, %v307
    %v309 = vadd.s32 %v304, 1
    %vm310 = vcmp.gt.s32.totalorder %v309, 0
    %v311 = vsel %vm310, %v309, 0
    %v312 = vshrl.u32 %v311, 5
    %v313 = vand.u32 %v311, 31
    %v314 = vsub.s32 32, %v313
    %v315 = vshrl.u32 683565275, %v314
    %v316 = vshll.u32 683565275, %v313
    %v317 = vshrl.u32 2475754826, %v314
    %v318 = vor.u32 %v316, %v317
    %v319 = vshll.u32 2475754826, %v313
    %v320 = vshrl.u32 2131351028, %v314
    %v321 = vor.u32 %v319, %v320
    %v322 = vshll.u32 2131351028, %v313
    %v323 = vshrl.u32 2102212464, %v314
    %v324 = vor.u32 %v322, %v323
    %v325 = vshll.u32 2102212464, %v313
    %v326 = vshrl.u32 920167782, %v314
    %v327 = vor.u32 %v325, %v326
    %v328 = vshll.u32 920167782, %v313
    %v329 = vshrl.u32 1326507024, %v314
    %v330 = vor.u32 %v328, %v329
    %vm331 = vcmp.lt.s32.totalorder %v312, 1
    %vm332 = vcmp.lt.s32.totalorder %v312, 2
    %vm333 = vcmp.lt.s32.totalorder %v312, 3
    %vm334 = vcmp.lt.s32.totalorder %v312, 4
    %v335 = vsel %vm331, %v315, %v318
    %v336 = vsel %vm334, %v324, 2102212464
    %v337 = vsel %vm333, %v321, %v336
    %v338 = vsel %vm332, %v335, %v337
    %v339 = vsel %vm331, %v318, %v321
    %v340 = vsel %vm334, %v327, 920167782
    %v341 = vsel %vm333, %v324, %v340
    %v342 = vsel %vm332, %v339, %v341
    %v343 = vsel %vm331, %v321, %v324
    %v344 = vsel %vm334, %v330, 1326507024
    %v345 = vsel %vm333, %v327, %v344
    %v346 = vsel %vm332, %v343, %v345
    %v347 = vshll.u32 %v307, 8
    %v348 = vmul.u32.u64.compose %v347, %v346
    %v349 = vextract.low.u32 %v348
    %v350 = vextract.high.u32 %v348
    %v351 = vmul.u32.u64.compose %v347, %v342
    %v352 = vextract.low.u32 %v351
    %v353 = vextract.high.u32 %v351
    %v354 = vmul.u32 %v347, %v338
    %v355 = vadd.s32 %v350, %v352
    %vm356 = vc.u32 %v350, %v352
    %v357 = vadd.s32 %v353, 1
    %v358 = vsel %vm356, %v357, %v353
    %v359 = vadd.s32 %v354, %v358
    %v360 = vadd.s32 %v359, 536870912
    %v361 = vshrl.u32 %v360, 30
    %v362 = vshll.u32 %v361, 30
    %v363 = vsub.s32 %v359, %v362
    %vm364 = vcmp.lt.s32.totalorder %v363, 0
    %v365 = vsub.s32 0, %v363
    %v366 = vsel %vm364, %v365, %v363
    %v367 = vclz %v366
    %v368 = vsub.s32 %v367, 2
    %vm369 = vcmp.gt.s32.totalorder 0, %v368
    %v370 = vsel %vm369, 0, %v368
    %v371 = vsub.s32 32, %v370
    %v372 = vshll.u32 %v363, %v370
    %v373 = vshrl.u32 %v355, %v371
    %v374 = vor.u32 %v372, %v373
    %v375 = vsub.s32 4294967266, %v370
    %v376 = vadd.s32 %v375, 127
    %v377 = vshll.u32 %v376, 23
    %v378 = vor.u32 4788187, %v377
    %v379 = vand.u32 2147483647, %v378
    %v381 = vcvt.s32.f32 %v374
    %v382 = vmul.f32 %v381, %v379
    %v383 = vxor.u32 %v382, 2147483648
    %v384 = vsel %vm301, %v383, %v382
    %v385 = vsub.s32 4, %v361
    %v386 = vsel %vm301, %v385, %v361
    %v387 = vsel %vm300, %v180, %v384
    %v388 = vsel %vm300, 0, %v386
    %v389 = vcosq.f32.pop %v387
    %v390 = vsinq.f32.pop %v387
    %vm391 = vweird.f32 %v180
    %v392 = vadd.s32 %v388, 3
    %v393 = vand.u32 %v392, 3
    %vm394 = vcmp.lt.s32.totalorder %v393, 2
    %vm395 = vcmp.eq.s32.totalorder %v393, 0
    %v396 = vxor.u32 %v390, 2147483648
    %v397 = vsel %vm395, %v389, %v396
    %vm398 = vcmp.eq.s32.totalorder %v393, 2
    %v399 = vxor.u32 %v389, 2147483648
    %v400 = vsel %vm398, %v399, %v390
    %v401 = vsel %vm394, %v397, %v400
    %v402 = vsel %vm391, nan, %v401
    %v403 = vand.u32 2147483647, %v181
    %vm404 = vcmp.le.f32.partialorder %v403, 0.7853982
    %vm405 = vcmp.lt.s32.totalorder %v181, 0
    %v406 = vand.u32 %v181, 2139095040
    %v407 = vshrl.u32 %v406, 23
    %v408 = vsub.s32 %v407, 127
    %v409 = vand.u32 2147483647, %v181
    %v410 = vand.u32 %v409, 8388607
    %v411 = vor.u32 %v410, 8388608
    %v412 = vsub.s32 0, %v411
    %v413 = vadd.s32 %v408, 1
    %vm414 = vcmp.gt.s32.totalorder %v413, 0
    %v415 = vsel %vm414, %v413, 0
    %v416 = vshrl.u32 %v415, 5
    %v417 = vand.u32 %v415, 31
    %v418 = vsub.s32 32, %v417
    %v419 = vshrl.u32 683565275, %v418
    %v420 = vshll.u32 683565275, %v417
    %v421 = vshrl.u32 2475754826, %v418
    %v422 = vor.u32 %v420, %v421
    %v423 = vshll.u32 2475754826, %v417
    %v424 = vshrl.u32 2131351028, %v418
    %v425 = vor.u32 %v423, %v424
    %v426 = vshll.u32 2131351028, %v417
    %v427 = vshrl.u32 2102212464, %v418
    %v428 = vor.u32 %v426, %v427
    %v429 = vshll.u32 2102212464, %v417
    %v430 = vshrl.u32 920167782, %v418
    %v431 = vor.u32 %v429, %v430
    %v432 = vshll.u32 920167782, %v417
    %v433 = vshrl.u32 1326507024, %v418
    %v434 = vor.u32 %v432, %v433
    %vm435 = vcmp.lt.s32.totalorder %v416, 1
    %vm436 = vcmp.lt.s32.totalorder %v416, 2
    %vm437 = vcmp.lt.s32.totalorder %v416, 3
    %vm438 = vcmp.lt.s32.totalorder %v416, 4
    %v439 = vsel %vm435, %v419, %v422
    %v440 = vsel %vm438, %v428, 2102212464
    %v441 = vsel %vm437, %v425, %v440
    %v442 = vsel %vm436, %v439, %v441
    %v443 = vsel %vm435, %v422, %v425
    %v444 = vsel %vm438, %v431, 920167782
    %v445 = vsel %vm437, %v428, %v444
    %v446 = vsel %vm436, %v443, %v445
    %v447 = vsel %vm435, %v425, %v428
    %v448 = vsel %vm438, %v434, 1326507024
    %v449 = vsel %vm437, %v431, %v448
    %v450 = vsel %vm436, %v447, %v449
    %v451 = vshll.u32 %v411, 8
    %v452 = vmul.u32.u64.compose %v451, %v450
    %v453 = vextract.low.u32 %v452
    %v454 = vextract.high.u32 %v452
    %v455 = vmul.u32.u64.compose %v451, %v446
    %v456 = vextract.low.u32 %v455
    %v457 = vextract.high.u32 %v455
    %v458 = vmul.u32 %v451, %v442
    %v459 = vadd.s32 %v454, %v456
    %vm460 = vc.u32 %v454, %v456
    %v461 = vadd.s32 %v457, 1
    %v462 = vsel %vm460, %v461, %v457
    %v463 = vadd.s32 %v458, %v462
    %v464 = vadd.s32 %v463, 536870912
    %v465 = vshrl.u32 %v464, 30
    %v466 = vshll.u32 %v465, 30
    %v467 = vsub.s32 %v463, %v466
    %vm468 = vcmp.lt.s32.totalorder %v467, 0
    %v469 = vsub.s32 0, %v467
    %v470 = vsel %vm468, %v469, %v467
    %v471 = vclz %v470
    %v472 = vsub.s32 %v471, 2
    %vm473 = vcmp.gt.s32.totalorder 0, %v472
    %v474 = vsel %vm473, 0, %v472
    %v475 = vsub.s32 32, %v474
    %v476 = vshll.u32 %v467, %v474
    %v477 = vshrl.u32 %v459, %v475
    %v478 = vor.u32 %v476, %v477
    %v479 = vsub.s32 4294967266, %v474
    %v480 = vadd.s32 %v479, 127
    %v481 = vshll.u32 %v480, 23
    %v482 = vor.u32 4788187, %v481
    %v483 = vand.u32 2147483647, %v482
    %v485 = vcvt.s32.f32 %v478
    %v486 = vmul.f32 %v485, %v483
    %v487 = vxor.u32 %v486, 2147483648
    %v488 = vsel %vm405, %v487, %v486
    %v489 = vsub.s32 4, %v465
    %v490 = vsel %vm405, %v489, %v465
    %v491 = vsel %vm404, %v181, %v488
    %v492 = vsel %vm404, 0, %v490
    %v493 = vcosq.f32.pop %v491
    %v494 = vsinq.f32.pop %v491
    %vm495 = vweird.f32 %v181
    %v496 = vadd.s32 %v492, 3
    %v497 = vand.u32 %v496, 3
    %vm498 = vcmp.lt.s32.totalorder %v497, 2
    %vm499 = vcmp.eq.s32.totalorder %v497, 0
    %v500 = vxor.u32 %v494, 2147483648
    %v501 = vsel %vm499, %v493, %v500
    %vm502 = vcmp.eq.s32.totalorder %v497, 2
    %v503 = vxor.u32 %v493, 2147483648
    %v504 = vsel %vm502, %v503, %v494
    %v505 = vsel %vm498, %v501, %v504
    %v506 = vsel %vm495, nan, %v505
    %v507 = vand.u32 2147483647, %v182
    %vm508 = vcmp.le.f32.partialorder %v507, 0.7853982
    %vm509 = vcmp.lt.s32.totalorder %v182, 0
    %v510 = vand.u32 %v182, 2139095040
    %v511 = vshrl.u32 %v510, 23
    %v512 = vsub.s32 %v511, 127
    %v513 = vand.u32 2147483647, %v182
    %v514 = vand.u32 %v513, 8388607
    %v515 = vor.u32 %v514, 8388608
    %v516 = vsub.s32 0, %v515
    %v517 = vadd.s32 %v512, 1
    %vm518 = vcmp.gt.s32.totalorder %v517, 0
    %v519 = vsel %vm518, %v517, 0
    %v520 = vshrl.u32 %v519, 5
    %v521 = vand.u32 %v519, 31
    %v522 = vsub.s32 32, %v521
    %v523 = vshrl.u32 683565275, %v522
    %v524 = vshll.u32 683565275, %v521
    %v525 = vshrl.u32 2475754826, %v522
    %v526 = vor.u32 %v524, %v525
    %v527 = vshll.u32 2475754826, %v521
    %v528 = vshrl.u32 2131351028, %v522
    %v529 = vor.u32 %v527, %v528
    %v530 = vshll.u32 2131351028, %v521
    %v531 = vshrl.u32 2102212464, %v522
    %v532 = vor.u32 %v530, %v531
    %v533 = vshll.u32 2102212464, %v521
    %v534 = vshrl.u32 920167782, %v522
    %v535 = vor.u32 %v533, %v534
    %v536 = vshll.u32 920167782, %v521
    %v537 = vshrl.u32 1326507024, %v522
    %v538 = vor.u32 %v536, %v537
    %vm539 = vcmp.lt.s32.totalorder %v520, 1
    %vm540 = vcmp.lt.s32.totalorder %v520, 2
    %vm541 = vcmp.lt.s32.totalorder %v520, 3
    %vm542 = vcmp.lt.s32.totalorder %v520, 4
    %v543 = vsel %vm539, %v523, %v526
    %v544 = vsel %vm542, %v532, 2102212464
    %v545 = vsel %vm541, %v529, %v544
    %v546 = vsel %vm540, %v543, %v545
    %v547 = vsel %vm539, %v526, %v529
    %v548 = vsel %vm542, %v535, 920167782
    %v549 = vsel %vm541, %v532, %v548
    %v550 = vsel %vm540, %v547, %v549
    %v551 = vsel %vm539, %v529, %v532
    %v552 = vsel %vm542, %v538, 1326507024
    %v553 = vsel %vm541, %v535, %v552
    %v554 = vsel %vm540, %v551, %v553
    %v555 = vshll.u32 %v515, 8
    %v556 = vmul.u32.u64.compose %v555, %v554
    %v557 = vextract.low.u32 %v556
    %v558 = vextract.high.u32 %v556
    %v559 = vmul.u32.u64.compose %v555, %v550
    %v560 = vextract.low.u32 %v559
    %v561 = vextract.high.u32 %v559
    %v562 = vmul.u32 %v555, %v546
    %v563 = vadd.s32 %v558, %v560
    %vm564 = vc.u32 %v558, %v560
    %v565 = vadd.s32 %v561, 1
    %v566 = vsel %vm564, %v565, %v561
    %v567 = vadd.s32 %v562, %v566
    %v568 = vadd.s32 %v567, 536870912
    %v569 = vshrl.u32 %v568, 30
    %v570 = vshll.u32 %v569, 30
    %v571 = vsub.s32 %v567, %v570
    %vm572 = vcmp.lt.s32.totalorder %v571, 0
    %v573 = vsub.s32 0, %v571
    %v574 = vsel %vm572, %v573, %v571
    %v575 = vclz %v574
    %v576 = vsub.s32 %v575, 2
    %vm577 = vcmp.gt.s32.totalorder 0, %v576
    %v578 = vsel %vm577, 0, %v576
    %v579 = vsub.s32 32, %v578
    %v580 = vshll.u32 %v571, %v578
    %v581 = vshrl.u32 %v563, %v579
    %v582 = vor.u32 %v580, %v581
    %v583 = vsub.s32 4294967266, %v578
    %v584 = vadd.s32 %v583, 127
    %v585 = vshll.u32 %v584, 23
    %v586 = vor.u32 4788187, %v585
    %v587 = vand.u32 2147483647, %v586
    %v589 = vcvt.s32.f32 %v582
    %v590 = vmul.f32 %v589, %v587
    %v591 = vxor.u32 %v590, 2147483648
    %v592 = vsel %vm509, %v591, %v590
    %v593 = vsub.s32 4, %v569
    %v594 = vsel %vm509, %v593, %v569
    %v595 = vsel %vm508, %v182, %v592
    %v596 = vsel %vm508, 0, %v594
    %v597 = vcosq.f32.pop %v595
    %v598 = vsinq.f32.pop %v595
    %vm599 = vweird.f32 %v182
    %v600 = vadd.s32 %v596, 3
    %v601 = vand.u32 %v600, 3
    %vm602 = vcmp.lt.s32.totalorder %v601, 2
    %vm603 = vcmp.eq.s32.totalorder %v601, 0
    %v604 = vxor.u32 %v598, 2147483648
    %v605 = vsel %vm603, %v597, %v604
    %vm606 = vcmp.eq.s32.totalorder %v601, 2
    %v607 = vxor.u32 %v597, 2147483648
    %v608 = vsel %vm606, %v607, %v598
    %v609 = vsel %vm602, %v605, %v608
    %v610 = vsel %vm599, nan, %v609
    %v611 = vand.u32 2147483647, %v183
    %vm612 = vcmp.le.f32.partialorder %v611, 0.7853982
    %vm613 = vcmp.lt.s32.totalorder %v183, 0
    %v614 = vand.u32 %v183, 2139095040
    %v615 = vshrl.u32 %v614, 23
    %v616 = vsub.s32 %v615, 127
    %v617 = vand.u32 2147483647, %v183
    %v618 = vand.u32 %v617, 8388607
    %v619 = vor.u32 %v618, 8388608
    %v620 = vsub.s32 0, %v619
    %v621 = vadd.s32 %v616, 1
    %vm622 = vcmp.gt.s32.totalorder %v621, 0
    %v623 = vsel %vm622, %v621, 0
    %v624 = vshrl.u32 %v623, 5
    %v625 = vand.u32 %v623, 31
    %v626 = vsub.s32 32, %v625
    %v627 = vshrl.u32 683565275, %v626
    %v628 = vshll.u32 683565275, %v625
    %v629 = vshrl.u32 2475754826, %v626
    %v630 = vor.u32 %v628, %v629
    %v631 = vshll.u32 2475754826, %v625
    %v632 = vshrl.u32 2131351028, %v626
    %v633 = vor.u32 %v631, %v632
    %v634 = vshll.u32 2131351028, %v625
    %v635 = vshrl.u32 2102212464, %v626
    %v636 = vor.u32 %v634, %v635
    %v637 = vshll.u32 2102212464, %v625
    %v638 = vshrl.u32 920167782, %v626
    %v639 = vor.u32 %v637, %v638
    %v640 = vshll.u32 920167782, %v625
    %v641 = vshrl.u32 1326507024, %v626
    %v642 = vor.u32 %v640, %v641
    %vm643 = vcmp.lt.s32.totalorder %v624, 1
    %vm644 = vcmp.lt.s32.totalorder %v624, 2
    %vm645 = vcmp.lt.s32.totalorder %v624, 3
    %vm646 = vcmp.lt.s32.totalorder %v624, 4
    %v647 = vsel %vm643, %v627, %v630
    %v648 = vsel %vm646, %v636, 2102212464
    %v649 = vsel %vm645, %v633, %v648
    %v650 = vsel %vm644, %v647, %v649
    %v651 = vsel %vm643, %v630, %v633
    %v652 = vsel %vm646, %v639, 920167782
    %v653 = vsel %vm645, %v636, %v652
    %v654 = vsel %vm644, %v651, %v653
    %v655 = vsel %vm643, %v633, %v636
    %v656 = vsel %vm646, %v642, 1326507024
    %v657 = vsel %vm645, %v639, %v656
    %v658 = vsel %vm644, %v655, %v657
    %v659 = vshll.u32 %v619, 8
    %v660 = vmul.u32.u64.compose %v659, %v658
    %v661 = vextract.low.u32 %v660
    %v662 = vextract.high.u32 %v660
    %v663 = vmul.u32.u64.compose %v659, %v654
    %v664 = vextract.low.u32 %v663
    %v665 = vextract.high.u32 %v663
    %v666 = vmul.u32 %v659, %v650
    %v667 = vadd.s32 %v662, %v664
    %vm668 = vc.u32 %v662, %v664
    %v669 = vadd.s32 %v665, 1
    %v670 = vsel %vm668, %v669, %v665
    %v671 = vadd.s32 %v666, %v670
    %v672 = vadd.s32 %v671, 536870912
    %v673 = vshrl.u32 %v672, 30
    %v674 = vshll.u32 %v673, 30
    %v675 = vsub.s32 %v671, %v674
    %vm676 = vcmp.lt.s32.totalorder %v675, 0
    %v677 = vsub.s32 0, %v675
    %v678 = vsel %vm676, %v677, %v675
    %v679 = vclz %v678
    %v680 = vsub.s32 %v679, 2
    %vm681 = vcmp.gt.s32.totalorder 0, %v680
    %v682 = vsel %vm681, 0, %v680
    %v683 = vsub.s32 32, %v682
    %v684 = vshll.u32 %v675, %v682
    %v685 = vshrl.u32 %v667, %v683
    %v686 = vor.u32 %v684, %v685
    %v687 = vsub.s32 4294967266, %v682
    %v688 = vadd.s32 %v687, 127
    %v689 = vshll.u32 %v688, 23
    %v690 = vor.u32 4788187, %v689
    %v691 = vand.u32 2147483647, %v690
    %v693 = vcvt.s32.f32 %v686
    %v694 = vmul.f32 %v693, %v691
    %v695 = vxor.u32 %v694, 2147483648
    %v696 = vsel %vm613, %v695, %v694
    %v697 = vsub.s32 4, %v673
    %v698 = vsel %vm613, %v697, %v673
    %v699 = vsel %vm612, %v183, %v696
    %v700 = vsel %vm612, 0, %v698
    %v701 = vcosq.f32.pop %v699
    %v702 = vsinq.f32.pop %v699
    %vm703 = vweird.f32 %v183
    %v704 = vadd.s32 %v700, 3
    %v705 = vand.u32 %v704, 3
    %vm706 = vcmp.lt.s32.totalorder %v705, 2
    %vm707 = vcmp.eq.s32.totalorder %v705, 0
    %v708 = vxor.u32 %v702, 2147483648
    %v709 = vsel %vm707, %v701, %v708
    %vm710 = vcmp.eq.s32.totalorder %v705, 2
    %v711 = vxor.u32 %v701, 2147483648
    %v712 = vsel %vm710, %v711, %v702
    %v713 = vsel %vm706, %v709, %v712
    %v714 = vsel %vm703, nan, %v713
    %v715 = vand.u32 2147483647, %v184
    %vm716 = vcmp.le.f32.partialorder %v715, 0.7853982
    %vm717 = vcmp.lt.s32.totalorder %v184, 0
    %v718 = vand.u32 %v184, 2139095040
    %v719 = vshrl.u32 %v718, 23
    %v720 = vsub.s32 %v719, 127
    %v721 = vand.u32 2147483647, %v184
    %v722 = vand.u32 %v721, 8388607
    %v723 = vor.u32 %v722, 8388608
    %v724 = vsub.s32 0, %v723
    %v725 = vadd.s32 %v720, 1
    %vm726 = vcmp.gt.s32.totalorder %v725, 0
    %v727 = vsel %vm726, %v725, 0
    %v728 = vshrl.u32 %v727, 5
    %v729 = vand.u32 %v727, 31
    %v730 = vsub.s32 32, %v729
    %v731 = vshrl.u32 683565275, %v730
    %v732 = vshll.u32 683565275, %v729
    %v733 = vshrl.u32 2475754826, %v730
    %v734 = vor.u32 %v732, %v733
    %v735 = vshll.u32 2475754826, %v729
    %v736 = vshrl.u32 2131351028, %v730
    %v737 = vor.u32 %v735, %v736
    %v738 = vshll.u32 2131351028, %v729
    %v739 = vshrl.u32 2102212464, %v730
    %v740 = vor.u32 %v738, %v739
    %v741 = vshll.u32 2102212464, %v729
    %v742 = vshrl.u32 920167782, %v730
    %v743 = vor.u32 %v741, %v742
    %v744 = vshll.u32 920167782, %v729
    %v745 = vshrl.u32 1326507024, %v730
    %v746 = vor.u32 %v744, %v745
    %vm747 = vcmp.lt.s32.totalorder %v728, 1
    %vm748 = vcmp.lt.s32.totalorder %v728, 2
    %vm749 = vcmp.lt.s32.totalorder %v728, 3
    %vm750 = vcmp.lt.s32.totalorder %v728, 4
    %v751 = vsel %vm747, %v731, %v734
    %v752 = vsel %vm750, %v740, 2102212464
    %v753 = vsel %vm749, %v737, %v752
    %v754 = vsel %vm748, %v751, %v753
    %v755 = vsel %vm747, %v734, %v737
    %v756 = vsel %vm750, %v743, 920167782
    %v757 = vsel %vm749, %v740, %v756
    %v758 = vsel %vm748, %v755, %v757
    %v759 = vsel %vm747, %v737, %v740
    %v760 = vsel %vm750, %v746, 1326507024
    %v761 = vsel %vm749, %v743, %v760
    %v762 = vsel %vm748, %v759, %v761
    %v763 = vshll.u32 %v723, 8
    %v764 = vmul.u32.u64.compose %v763, %v762
    %v765 = vextract.low.u32 %v764
    %v766 = vextract.high.u32 %v764
    %v767 = vmul.u32.u64.compose %v763, %v758
    %v768 = vextract.low.u32 %v767
    %v769 = vextract.high.u32 %v767
    %v770 = vmul.u32 %v763, %v754
    %v771 = vadd.s32 %v766, %v768
    %vm772 = vc.u32 %v766, %v768
    %v773 = vadd.s32 %v769, 1
    %v774 = vsel %vm772, %v773, %v769
    %v775 = vadd.s32 %v770, %v774
    %v776 = vadd.s32 %v775, 536870912
    %v777 = vshrl.u32 %v776, 30
    %v778 = vshll.u32 %v777, 30
    %v779 = vsub.s32 %v775, %v778
    %vm780 = vcmp.lt.s32.totalorder %v779, 0
    %v781 = vsub.s32 0, %v779
    %v782 = vsel %vm780, %v781, %v779
    %v783 = vclz %v782
    %v784 = vsub.s32 %v783, 2
    %vm785 = vcmp.gt.s32.totalorder 0, %v784
    %v786 = vsel %vm785, 0, %v784
    %v787 = vsub.s32 32, %v786
    %v788 = vshll.u32 %v779, %v786
    %v789 = vshrl.u32 %v771, %v787
    %v790 = vor.u32 %v788, %v789
    %v791 = vsub.s32 4294967266, %v786
    %v792 = vadd.s32 %v791, 127
    %v793 = vshll.u32 %v792, 23
    %v794 = vor.u32 4788187, %v793
    %v795 = vand.u32 2147483647, %v794
    %v797 = vcvt.s32.f32 %v790
    %v798 = vmul.f32 %v797, %v795
    %v799 = vxor.u32 %v798, 2147483648
    %v800 = vsel %vm717, %v799, %v798
    %v801 = vsub.s32 4, %v777
    %v802 = vsel %vm717, %v801, %v777
    %v803 = vsel %vm716, %v184, %v800
    %v804 = vsel %vm716, 0, %v802
    %v805 = vcosq.f32.pop %v803
    %v806 = vsinq.f32.pop %v803
    %vm807 = vweird.f32 %v184
    %v808 = vadd.s32 %v804, 3
    %v809 = vand.u32 %v808, 3
    %vm810 = vcmp.lt.s32.totalorder %v809, 2
    %vm811 = vcmp.eq.s32.totalorder %v809, 0
    %v812 = vxor.u32 %v806, 2147483648
    %v813 = vsel %vm811, %v805, %v812
    %vm814 = vcmp.eq.s32.totalorder %v809, 2
    %v815 = vxor.u32 %v805, 2147483648
    %v816 = vsel %vm814, %v815, %v806
    %v817 = vsel %vm810, %v813, %v816
    %v818 = vsel %vm807, nan, %v817
    %v819 = vand.u32 2147483647, %v185
    %vm820 = vcmp.le.f32.partialorder %v819, 0.7853982
    %vm821 = vcmp.lt.s32.totalorder %v185, 0
    %v822 = vand.u32 %v185, 2139095040
    %v823 = vshrl.u32 %v822, 23
    %v824 = vsub.s32 %v823, 127
    %v825 = vand.u32 2147483647, %v185
    %v826 = vand.u32 %v825, 8388607
    %v827 = vor.u32 %v826, 8388608
    %v828 = vsub.s32 0, %v827
    %v829 = vadd.s32 %v824, 1
    %vm830 = vcmp.gt.s32.totalorder %v829, 0
    %v831 = vsel %vm830, %v829, 0
    %v832 = vshrl.u32 %v831, 5
    %v833 = vand.u32 %v831, 31
    %v834 = vsub.s32 32, %v833
    %v835 = vshrl.u32 683565275, %v834
    %v836 = vshll.u32 683565275, %v833
    %v837 = vshrl.u32 2475754826, %v834
    %v838 = vor.u32 %v836, %v837
    %v839 = vshll.u32 2475754826, %v833
    %v840 = vshrl.u32 2131351028, %v834
    %v841 = vor.u32 %v839, %v840
    %v842 = vshll.u32 2131351028, %v833
    %v843 = vshrl.u32 2102212464, %v834
    %v844 = vor.u32 %v842, %v843
    %v845 = vshll.u32 2102212464, %v833
    %v846 = vshrl.u32 920167782, %v834
    %v847 = vor.u32 %v845, %v846
    %v848 = vshll.u32 920167782, %v833
    %v849 = vshrl.u32 1326507024, %v834
    %v850 = vor.u32 %v848, %v849
    %vm851 = vcmp.lt.s32.totalorder %v832, 1
    %vm852 = vcmp.lt.s32.totalorder %v832, 2
    %vm853 = vcmp.lt.s32.totalorder %v832, 3
    %vm854 = vcmp.lt.s32.totalorder %v832, 4
    %v855 = vsel %vm851, %v835, %v838
    %v856 = vsel %vm854, %v844, 2102212464
    %v857 = vsel %vm853, %v841, %v856
    %v858 = vsel %vm852, %v855, %v857
    %v859 = vsel %vm851, %v838, %v841
    %v860 = vsel %vm854, %v847, 920167782
    %v861 = vsel %vm853, %v844, %v860
    %v862 = vsel %vm852, %v859, %v861
    %v863 = vsel %vm851, %v841, %v844
    %v864 = vsel %vm854, %v850, 1326507024
    %v865 = vsel %vm853, %v847, %v864
    %v866 = vsel %vm852, %v863, %v865
    %v867 = vshll.u32 %v827, 8
    %v868 = vmul.u32.u64.compose %v867, %v866
    %v869 = vextract.low.u32 %v868
    %v870 = vextract.high.u32 %v868
    %v871 = vmul.u32.u64.compose %v867, %v862
    %v872 = vextract.low.u32 %v871
    %v873 = vextract.high.u32 %v871
    %v874 = vmul.u32 %v867, %v858
    %v875 = vadd.s32 %v870, %v872
    %vm876 = vc.u32 %v870, %v872
    %v877 = vadd.s32 %v873, 1
    %v878 = vsel %vm876, %v877, %v873
    %v879 = vadd.s32 %v874, %v878
    %v880 = vadd.s32 %v879, 536870912
    %v881 = vshrl.u32 %v880, 30
    %v882 = vshll.u32 %v881, 30
    %v883 = vsub.s32 %v879, %v882
    %vm884 = vcmp.lt.s32.totalorder %v883, 0
    %v885 = vsub.s32 0, %v883
    %v886 = vsel %vm884, %v885, %v883
    %v887 = vclz %v886
    %v888 = vsub.s32 %v887, 2
    %vm889 = vcmp.gt.s32.totalorder 0, %v888
    %v890 = vsel %vm889, 0, %v888
    %v891 = vsub.s32 32, %v890
    %v892 = vshll.u32 %v883, %v890
    %v893 = vshrl.u32 %v875, %v891
    %v894 = vor.u32 %v892, %v893
    %v895 = vsub.s32 4294967266, %v890
    %v896 = vadd.s32 %v895, 127
    %v897 = vshll.u32 %v896, 23
    %v898 = vor.u32 4788187, %v897
    %v899 = vand.u32 2147483647, %v898
    %v901 = vcvt.s32.f32 %v894
    %v902 = vmul.f32 %v901, %v899
    %v903 = vxor.u32 %v902, 2147483648
    %v904 = vsel %vm821, %v903, %v902
    %v905 = vsub.s32 4, %v881
    %v906 = vsel %vm821, %v905, %v881
    %v907 = vsel %vm820, %v185, %v904
    %v908 = vsel %vm820, 0, %v906
    %v909 = vcosq.f32.pop %v907
    %v910 = vsinq.f32.pop %v907
    %vm911 = vweird.f32 %v185
    %v912 = vadd.s32 %v908, 3
    %v913 = vand.u32 %v912, 3
    %vm914 = vcmp.lt.s32.totalorder %v913, 2
    %vm915 = vcmp.eq.s32.totalorder %v913, 0
    %v916 = vxor.u32 %v910, 2147483648
    %v917 = vsel %vm915, %v909, %v916
    %vm918 = vcmp.eq.s32.totalorder %v913, 2
    %v919 = vxor.u32 %v909, 2147483648
    %v920 = vsel %vm918, %v919, %v910
    %v921 = vsel %vm914, %v917, %v920
    %v922 = vsel %vm911, nan, %v921
    %v923 = vand.u32 2147483647, %v186
    %vm924 = vcmp.le.f32.partialorder %v923, 0.7853982
    %vm925 = vcmp.lt.s32.totalorder %v186, 0
    %v926 = vand.u32 %v186, 2139095040
    %v927 = vshrl.u32 %v926, 23
    %v928 = vsub.s32 %v927, 127
    %v929 = vand.u32 2147483647, %v186
    %v930 = vand.u32 %v929, 8388607
    %v931 = vor.u32 %v930, 8388608
    %v932 = vsub.s32 0, %v931
    %v933 = vadd.s32 %v928, 1
    %vm934 = vcmp.gt.s32.totalorder %v933, 0
    %v935 = vsel %vm934, %v933, 0
    %v936 = vshrl.u32 %v935, 5
    %v937 = vand.u32 %v935, 31
    %v938 = vsub.s32 32, %v937
    %v939 = vshrl.u32 683565275, %v938
    %v940 = vshll.u32 683565275, %v937
    %v941 = vshrl.u32 2475754826, %v938
    %v942 = vor.u32 %v940, %v941
    %v943 = vshll.u32 2475754826, %v937
    %v944 = vshrl.u32 2131351028, %v938
    %v945 = vor.u32 %v943, %v944
    %v946 = vshll.u32 2131351028, %v937
    %v947 = vshrl.u32 2102212464, %v938
    %v948 = vor.u32 %v946, %v947
    %v949 = vshll.u32 2102212464, %v937
    %v950 = vshrl.u32 920167782, %v938
    %v951 = vor.u32 %v949, %v950
    %v952 = vshll.u32 920167782, %v937
    %v953 = vshrl.u32 1326507024, %v938
    %v954 = vor.u32 %v952, %v953
    %vm955 = vcmp.lt.s32.totalorder %v936, 1
    %vm956 = vcmp.lt.s32.totalorder %v936, 2
    %vm957 = vcmp.lt.s32.totalorder %v936, 3
    %vm958 = vcmp.lt.s32.totalorder %v936, 4
    %v959 = vsel %vm955, %v939, %v942
    %v960 = vsel %vm958, %v948, 2102212464
    %v961 = vsel %vm957, %v945, %v960
    %v962 = vsel %vm956, %v959, %v961
    %v963 = vsel %vm955, %v942, %v945
    %v964 = vsel %vm958, %v951, 920167782
    %v965 = vsel %vm957, %v948, %v964
    %v966 = vsel %vm956, %v963, %v965
    %v967 = vsel %vm955, %v945, %v948
    %v968 = vsel %vm958, %v954, 1326507024
    %v969 = vsel %vm957, %v951, %v968
    %v970 = vsel %vm956, %v967, %v969
    %v971 = vshll.u32 %v931, 8
    %v972 = vmul.u32.u64.compose %v971, %v970
    %v973 = vextract.low.u32 %v972
    %v974 = vextract.high.u32 %v972
    %v975 = vmul.u32.u64.compose %v971, %v966
    %v976 = vextract.low.u32 %v975
    %v977 = vextract.high.u32 %v975
    %v978 = vmul.u32 %v971, %v962
    %v979 = vadd.s32 %v974, %v976
    %vm980 = vc.u32 %v974, %v976
    %v981 = vadd.s32 %v977, 1
    %v982 = vsel %vm980, %v981, %v977
    %v983 = vadd.s32 %v978, %v982
    %v984 = vadd.s32 %v983, 536870912
    %v985 = vshrl.u32 %v984, 30
    %v986 = vshll.u32 %v985, 30
    %v987 = vsub.s32 %v983, %v986
    %vm988 = vcmp.lt.s32.totalorder %v987, 0
    %v989 = vsub.s32 0, %v987
    %v990 = vsel %vm988, %v989, %v987
    %v991 = vclz %v990
    %v992 = vsub.s32 %v991, 2
    %vm993 = vcmp.gt.s32.totalorder 0, %v992
    %v994 = vsel %vm993, 0, %v992
    %v995 = vsub.s32 32, %v994
    %v996 = vshll.u32 %v987, %v994
    %v997 = vshrl.u32 %v979, %v995
    %v998 = vor.u32 %v996, %v997
    %v999 = vsub.s32 4294967266, %v994
    %v1000 = vadd.s32 %v999, 127
    %v1001 = vshll.u32 %v1000, 23
    %v1002 = vor.u32 4788187, %v1001
    %v1003 = vand.u32 2147483647, %v1002
    %v1005 = vcvt.s32.f32 %v998
    %v1006 = vmul.f32 %v1005, %v1003
    %v1007 = vxor.u32 %v1006, 2147483648
    %v1008 = vsel %vm925, %v1007, %v1006
    %v1009 = vsub.s32 4, %v985
    %v1010 = vsel %vm925, %v1009, %v985
    %v1011 = vsel %vm924, %v186, %v1008
    %v1012 = vsel %vm924, 0, %v1010
    %v1013 = vcosq.f32.pop %v1011
    %v1014 = vsinq.f32.pop %v1011
    %vm1015 = vweird.f32 %v186
    %v1016 = vadd.s32 %v1012, 3
    %v1017 = vand.u32 %v1016, 3
    %vm1018 = vcmp.lt.s32.totalorder %v1017, 2
    %vm1019 = vcmp.eq.s32.totalorder %v1017, 0
    %v1020 = vxor.u32 %v1014, 2147483648
    %v1021 = vsel %vm1019, %v1013, %v1020
    %vm1022 = vcmp.eq.s32.totalorder %v1017, 2
    %v1023 = vxor.u32 %v1013, 2147483648
    %v1024 = vsel %vm1022, %v1023, %v1014
    %v1025 = vsel %vm1018, %v1021, %v1024
    %v1026 = vsel %vm1015, nan, %v1025
    %v1027 = vand.u32 2147483647, %v187
    %vm1028 = vcmp.le.f32.partialorder %v1027, 0.7853982
    %vm1029 = vcmp.lt.s32.totalorder %v187, 0
    %v1030 = vand.u32 %v187, 2139095040
    %v1031 = vshrl.u32 %v1030, 23
    %v1032 = vsub.s32 %v1031, 127
    %v1033 = vand.u32 2147483647, %v187
    %v1034 = vand.u32 %v1033, 8388607
    %v1035 = vor.u32 %v1034, 8388608
    %v1036 = vsub.s32 0, %v1035
    %v1037 = vadd.s32 %v1032, 1
    %vm1038 = vcmp.gt.s32.totalorder %v1037, 0
    %v1039 = vsel %vm1038, %v1037, 0
    %v1040 = vshrl.u32 %v1039, 5
    %v1041 = vand.u32 %v1039, 31
    %v1042 = vsub.s32 32, %v1041
    %v1043 = vshrl.u32 683565275, %v1042
    %v1044 = vshll.u32 683565275, %v1041
    %v1045 = vshrl.u32 2475754826, %v1042
    %v1046 = vor.u32 %v1044, %v1045
    %v1047 = vshll.u32 2475754826, %v1041
    %v1048 = vshrl.u32 2131351028, %v1042
    %v1049 = vor.u32 %v1047, %v1048
    %v1050 = vshll.u32 2131351028, %v1041
    %v1051 = vshrl.u32 2102212464, %v1042
    %v1052 = vor.u32 %v1050, %v1051
    %v1053 = vshll.u32 2102212464, %v1041
    %v1054 = vshrl.u32 920167782, %v1042
    %v1055 = vor.u32 %v1053, %v1054
    %v1056 = vshll.u32 920167782, %v1041
    %v1057 = vshrl.u32 1326507024, %v1042
    %v1058 = vor.u32 %v1056, %v1057
    %vm1059 = vcmp.lt.s32.totalorder %v1040, 1
    %vm1060 = vcmp.lt.s32.totalorder %v1040, 2
    %vm1061 = vcmp.lt.s32.totalorder %v1040, 3
    %vm1062 = vcmp.lt.s32.totalorder %v1040, 4
    %v1063 = vsel %vm1059, %v1043, %v1046
    %v1064 = vsel %vm1062, %v1052, 2102212464
    %v1065 = vsel %vm1061, %v1049, %v1064
    %v1066 = vsel %vm1060, %v1063, %v1065
    %v1067 = vsel %vm1059, %v1046, %v1049
    %v1068 = vsel %vm1062, %v1055, 920167782
    %v1069 = vsel %vm1061, %v1052, %v1068
    %v1070 = vsel %vm1060, %v1067, %v1069
    %v1071 = vsel %vm1059, %v1049, %v1052
    %v1072 = vsel %vm1062, %v1058, 1326507024
    %v1073 = vsel %vm1061, %v1055, %v1072
    %v1074 = vsel %vm1060, %v1071, %v1073
    %v1075 = vshll.u32 %v1035, 8
    %v1076 = vmul.u32.u64.compose %v1075, %v1074
    %v1077 = vextract.low.u32 %v1076
    %v1078 = vextract.high.u32 %v1076
    %v1079 = vmul.u32.u64.compose %v1075, %v1070
    %v1080 = vextract.low.u32 %v1079
    %v1081 = vextract.high.u32 %v1079
    %v1082 = vmul.u32 %v1075, %v1066
    %v1083 = vadd.s32 %v1078, %v1080
    %vm1084 = vc.u32 %v1078, %v1080
    %v1085 = vadd.s32 %v1081, 1
    %v1086 = vsel %vm1084, %v1085, %v1081
    %v1087 = vadd.s32 %v1082, %v1086
    %v1088 = vadd.s32 %v1087, 536870912
    %v1089 = vshrl.u32 %v1088, 30
    %v1090 = vshll.u32 %v1089, 30
    %v1091 = vsub.s32 %v1087, %v1090
    %vm1092 = vcmp.lt.s32.totalorder %v1091, 0
    %v1093 = vsub.s32 0, %v1091
    %v1094 = vsel %vm1092, %v1093, %v1091
    %v1095 = vclz %v1094
    %v1096 = vsub.s32 %v1095, 2
    %vm1097 = vcmp.gt.s32.totalorder 0, %v1096
    %v1098 = vsel %vm1097, 0, %v1096
    %v1099 = vsub.s32 32, %v1098
    %v1100 = vshll.u32 %v1091, %v1098
    %v1101 = vshrl.u32 %v1083, %v1099
    %v1102 = vor.u32 %v1100, %v1101
    %v1103 = vsub.s32 4294967266, %v1098
    %v1104 = vadd.s32 %v1103, 127
    %v1105 = vshll.u32 %v1104, 23
    %v1106 = vor.u32 4788187, %v1105
    %v1107 = vand.u32 2147483647, %v1106
    %v1109 = vcvt.s32.f32 %v1102
    %v1110 = vmul.f32 %v1109, %v1107
    %v1111 = vxor.u32 %v1110, 2147483648
    %v1112 = vsel %vm1029, %v1111, %v1110
    %v1113 = vsub.s32 4, %v1089
    %v1114 = vsel %vm1029, %v1113, %v1089
    %v1115 = vsel %vm1028, %v187, %v1112
    %v1116 = vsel %vm1028, 0, %v1114
    %v1117 = vcosq.f32.pop %v1115
    %v1118 = vsinq.f32.pop %v1115
    %vm1119 = vweird.f32 %v187
    %v1120 = vadd.s32 %v1116, 3
    %v1121 = vand.u32 %v1120, 3
    %vm1122 = vcmp.lt.s32.totalorder %v1121, 2
    %vm1123 = vcmp.eq.s32.totalorder %v1121, 0
    %v1124 = vxor.u32 %v1118, 2147483648
    %v1125 = vsel %vm1123, %v1117, %v1124
    %vm1126 = vcmp.eq.s32.totalorder %v1121, 2
    %v1127 = vxor.u32 %v1117, 2147483648
    %v1128 = vsel %vm1126, %v1127, %v1118
    %v1129 = vsel %vm1122, %v1125, %v1128
    %v1130 = vsel %vm1119, nan, %v1129
    %v1131 = vand.u32 2147483647, %v188
    %vm1132 = vcmp.le.f32.partialorder %v1131, 0.7853982
    %vm1133 = vcmp.lt.s32.totalorder %v188, 0
    %v1134 = vand.u32 %v188, 2139095040
    %v1135 = vshrl.u32 %v1134, 23
    %v1136 = vsub.s32 %v1135, 127
    %v1137 = vand.u32 2147483647, %v188
    %v1138 = vand.u32 %v1137, 8388607
    %v1139 = vor.u32 %v1138, 8388608
    %v1140 = vsub.s32 0, %v1139
    %v1141 = vadd.s32 %v1136, 1
    %vm1142 = vcmp.gt.s32.totalorder %v1141, 0
    %v1143 = vsel %vm1142, %v1141, 0
    %v1144 = vshrl.u32 %v1143, 5
    %v1145 = vand.u32 %v1143, 31
    %v1146 = vsub.s32 32, %v1145
    %v1147 = vshrl.u32 683565275, %v1146
    %v1148 = vshll.u32 683565275, %v1145
    %v1149 = vshrl.u32 2475754826, %v1146
    %v1150 = vor.u32 %v1148, %v1149
    %v1151 = vshll.u32 2475754826, %v1145
    %v1152 = vshrl.u32 2131351028, %v1146
    %v1153 = vor.u32 %v1151, %v1152
    %v1154 = vshll.u32 2131351028, %v1145
    %v1155 = vshrl.u32 2102212464, %v1146
    %v1156 = vor.u32 %v1154, %v1155
    %v1157 = vshll.u32 2102212464, %v1145
    %v1158 = vshrl.u32 920167782, %v1146
    %v1159 = vor.u32 %v1157, %v1158
    %v1160 = vshll.u32 920167782, %v1145
    %v1161 = vshrl.u32 1326507024, %v1146
    %v1162 = vor.u32 %v1160, %v1161
    %vm1163 = vcmp.lt.s32.totalorder %v1144, 1
    %vm1164 = vcmp.lt.s32.totalorder %v1144, 2
    %vm1165 = vcmp.lt.s32.totalorder %v1144, 3
    %vm1166 = vcmp.lt.s32.totalorder %v1144, 4
    %v1167 = vsel %vm1163, %v1147, %v1150
    %v1168 = vsel %vm1166, %v1156, 2102212464
    %v1169 = vsel %vm1165, %v1153, %v1168
    %v1170 = vsel %vm1164, %v1167, %v1169
    %v1171 = vsel %vm1163, %v1150, %v1153
    %v1172 = vsel %vm1166, %v1159, 920167782
    %v1173 = vsel %vm1165, %v1156, %v1172
    %v1174 = vsel %vm1164, %v1171, %v1173
    %v1175 = vsel %vm1163, %v1153, %v1156
    %v1176 = vsel %vm1166, %v1162, 1326507024
    %v1177 = vsel %vm1165, %v1159, %v1176
    %v1178 = vsel %vm1164, %v1175, %v1177
    %v1179 = vshll.u32 %v1139, 8
    %v1180 = vmul.u32.u64.compose %v1179, %v1178
    %v1181 = vextract.low.u32 %v1180
    %v1182 = vextract.high.u32 %v1180
    %v1183 = vmul.u32.u64.compose %v1179, %v1174
    %v1184 = vextract.low.u32 %v1183
    %v1185 = vextract.high.u32 %v1183
    %v1186 = vmul.u32 %v1179, %v1170
    %v1187 = vadd.s32 %v1182, %v1184
    %vm1188 = vc.u32 %v1182, %v1184
    %v1189 = vadd.s32 %v1185, 1
    %v1190 = vsel %vm1188, %v1189, %v1185
    %v1191 = vadd.s32 %v1186, %v1190
    %v1192 = vadd.s32 %v1191, 536870912
    %v1193 = vshrl.u32 %v1192, 30
    %v1194 = vshll.u32 %v1193, 30
    %v1195 = vsub.s32 %v1191, %v1194
    %vm1196 = vcmp.lt.s32.totalorder %v1195, 0
    %v1197 = vsub.s32 0, %v1195
    %v1198 = vsel %vm1196, %v1197, %v1195
    %v1199 = vclz %v1198
    %v1200 = vsub.s32 %v1199, 2
    %vm1201 = vcmp.gt.s32.totalorder 0, %v1200
    %v1202 = vsel %vm1201, 0, %v1200
    %v1203 = vsub.s32 32, %v1202
    %v1204 = vshll.u32 %v1195, %v1202
    %v1205 = vshrl.u32 %v1187, %v1203
    %v1206 = vor.u32 %v1204, %v1205
    %v1207 = vsub.s32 4294967266, %v1202
    %v1208 = vadd.s32 %v1207, 127
    %v1209 = vshll.u32 %v1208, 23
    %v1210 = vor.u32 4788187, %v1209
    %v1211 = vand.u32 2147483647, %v1210
    %v1213 = vcvt.s32.f32 %v1206
    %v1214 = vmul.f32 %v1213, %v1211
    %v1215 = vxor.u32 %v1214, 2147483648
    %v1216 = vsel %vm1133, %v1215, %v1214
    %v1217 = vsub.s32 4, %v1193
    %v1218 = vsel %vm1133, %v1217, %v1193
    %v1219 = vsel %vm1132, %v188, %v1216
    %v1220 = vsel %vm1132, 0, %v1218
    %v1221 = vcosq.f32.pop %v1219
    %v1222 = vsinq.f32.pop %v1219
    %vm1223 = vweird.f32 %v188
    %v1224 = vadd.s32 %v1220, 3
    %v1225 = vand.u32 %v1224, 3
    %vm1226 = vcmp.lt.s32.totalorder %v1225, 2
    %vm1227 = vcmp.eq.s32.totalorder %v1225, 0
    %v1228 = vxor.u32 %v1222, 2147483648
    %v1229 = vsel %vm1227, %v1221, %v1228
    %vm1230 = vcmp.eq.s32.totalorder %v1225, 2
    %v1231 = vxor.u32 %v1221, 2147483648
    %v1232 = vsel %vm1230, %v1231, %v1222
    %v1233 = vsel %vm1226, %v1229, %v1232
    %v1234 = vsel %vm1223, nan, %v1233
    %v1235 = vand.u32 2147483647, %v189
    %vm1236 = vcmp.le.f32.partialorder %v1235, 0.7853982
    %vm1237 = vcmp.lt.s32.totalorder %v189, 0
    %v1238 = vand.u32 %v189, 2139095040
    %v1239 = vshrl.u32 %v1238, 23
    %v1240 = vsub.s32 %v1239, 127
    %v1241 = vand.u32 2147483647, %v189
    %v1242 = vand.u32 %v1241, 8388607
    %v1243 = vor.u32 %v1242, 8388608
    %v1244 = vsub.s32 0, %v1243
    %v1245 = vadd.s32 %v1240, 1
    %vm1246 = vcmp.gt.s32.totalorder %v1245, 0
    %v1247 = vsel %vm1246, %v1245, 0
    %v1248 = vshrl.u32 %v1247, 5
    %v1249 = vand.u32 %v1247, 31
    %v1250 = vsub.s32 32, %v1249
    %v1251 = vshrl.u32 683565275, %v1250
    %v1252 = vshll.u32 683565275, %v1249
    %v1253 = vshrl.u32 2475754826, %v1250
    %v1254 = vor.u32 %v1252, %v1253
    %v1255 = vshll.u32 2475754826, %v1249
    %v1256 = vshrl.u32 2131351028, %v1250
    %v1257 = vor.u32 %v1255, %v1256
    %v1258 = vshll.u32 2131351028, %v1249
    %v1259 = vshrl.u32 2102212464, %v1250
    %v1260 = vor.u32 %v1258, %v1259
    %v1261 = vshll.u32 2102212464, %v1249
    %v1262 = vshrl.u32 920167782, %v1250
    %v1263 = vor.u32 %v1261, %v1262
    %v1264 = vshll.u32 920167782, %v1249
    %v1265 = vshrl.u32 1326507024, %v1250
    %v1266 = vor.u32 %v1264, %v1265
    %vm1267 = vcmp.lt.s32.totalorder %v1248, 1
    %vm1268 = vcmp.lt.s32.totalorder %v1248, 2
    %vm1269 = vcmp.lt.s32.totalorder %v1248, 3
    %vm1270 = vcmp.lt.s32.totalorder %v1248, 4
    %v1271 = vsel %vm1267, %v1251, %v1254
    %v1272 = vsel %vm1270, %v1260, 2102212464
    %v1273 = vsel %vm1269, %v1257, %v1272
    %v1274 = vsel %vm1268, %v1271, %v1273
    %v1275 = vsel %vm1267, %v1254, %v1257
    %v1276 = vsel %vm1270, %v1263, 920167782
    %v1277 = vsel %vm1269, %v1260, %v1276
    %v1278 = vsel %vm1268, %v1275, %v1277
    %v1279 = vsel %vm1267, %v1257, %v1260
    %v1280 = vsel %vm1270, %v1266, 1326507024
    %v1281 = vsel %vm1269, %v1263, %v1280
    %v1282 = vsel %vm1268, %v1279, %v1281
    %v1283 = vshll.u32 %v1243, 8
    %v1284 = vmul.u32.u64.compose %v1283, %v1282
    %v1285 = vextract.low.u32 %v1284
    %v1286 = vextract.high.u32 %v1284
    %v1287 = vmul.u32.u64.compose %v1283, %v1278
    %v1288 = vextract.low.u32 %v1287
    %v1289 = vextract.high.u32 %v1287
    %v1290 = vmul.u32 %v1283, %v1274
    %v1291 = vadd.s32 %v1286, %v1288
    %vm1292 = vc.u32 %v1286, %v1288
    %v1293 = vadd.s32 %v1289, 1
    %v1294 = vsel %vm1292, %v1293, %v1289
    %v1295 = vadd.s32 %v1290, %v1294
    %v1296 = vadd.s32 %v1295, 536870912
    %v1297 = vshrl.u32 %v1296, 30
    %v1298 = vshll.u32 %v1297, 30
    %v1299 = vsub.s32 %v1295, %v1298
    %vm1300 = vcmp.lt.s32.totalorder %v1299, 0
    %v1301 = vsub.s32 0, %v1299
    %v1302 = vsel %vm1300, %v1301, %v1299
    %v1303 = vclz %v1302
    %v1304 = vsub.s32 %v1303, 2
    %vm1305 = vcmp.gt.s32.totalorder 0, %v1304
    %v1306 = vsel %vm1305, 0, %v1304
    %v1307 = vsub.s32 32, %v1306
    %v1308 = vshll.u32 %v1299, %v1306
    %v1309 = vshrl.u32 %v1291, %v1307
    %v1310 = vor.u32 %v1308, %v1309
    %v1311 = vsub.s32 4294967266, %v1306
    %v1312 = vadd.s32 %v1311, 127
    %v1313 = vshll.u32 %v1312, 23
    %v1314 = vor.u32 4788187, %v1313
    %v1315 = vand.u32 2147483647, %v1314
    %v1317 = vcvt.s32.f32 %v1310
    %v1318 = vmul.f32 %v1317, %v1315
    %v1319 = vxor.u32 %v1318, 2147483648
    %v1320 = vsel %vm1237, %v1319, %v1318
    %v1321 = vsub.s32 4, %v1297
    %v1322 = vsel %vm1237, %v1321, %v1297
    %v1323 = vsel %vm1236, %v189, %v1320
    %v1324 = vsel %vm1236, 0, %v1322
    %v1325 = vcosq.f32.pop %v1323
    %v1326 = vsinq.f32.pop %v1323
    %vm1327 = vweird.f32 %v189
    %v1328 = vadd.s32 %v1324, 3
    %v1329 = vand.u32 %v1328, 3
    %vm1330 = vcmp.lt.s32.totalorder %v1329, 2
    %vm1331 = vcmp.eq.s32.totalorder %v1329, 0
    %v1332 = vxor.u32 %v1326, 2147483648
    %v1333 = vsel %vm1331, %v1325, %v1332
    %vm1334 = vcmp.eq.s32.totalorder %v1329, 2
    %v1335 = vxor.u32 %v1325, 2147483648
    %v1336 = vsel %vm1334, %v1335, %v1326
    %v1337 = vsel %vm1330, %v1333, %v1336
    %v1338 = vsel %vm1327, nan, %v1337
    %v1339 = vand.u32 2147483647, %v190
    %vm1340 = vcmp.le.f32.partialorder %v1339, 0.7853982
    %vm1341 = vcmp.lt.s32.totalorder %v190, 0
    %v1342 = vand.u32 %v190, 2139095040
    %v1343 = vshrl.u32 %v1342, 23
    %v1344 = vsub.s32 %v1343, 127
    %v1345 = vand.u32 2147483647, %v190
    %v1346 = vand.u32 %v1345, 8388607
    %v1347 = vor.u32 %v1346, 8388608
    %v1348 = vsub.s32 0, %v1347
    %v1349 = vadd.s32 %v1344, 1
    %vm1350 = vcmp.gt.s32.totalorder %v1349, 0
    %v1351 = vsel %vm1350, %v1349, 0
    %v1352 = vshrl.u32 %v1351, 5
    %v1353 = vand.u32 %v1351, 31
    %v1354 = vsub.s32 32, %v1353
    %v1355 = vshrl.u32 683565275, %v1354
    %v1356 = vshll.u32 683565275, %v1353
    %v1357 = vshrl.u32 2475754826, %v1354
    %v1358 = vor.u32 %v1356, %v1357
    %v1359 = vshll.u32 2475754826, %v1353
    %v1360 = vshrl.u32 2131351028, %v1354
    %v1361 = vor.u32 %v1359, %v1360
    %v1362 = vshll.u32 2131351028, %v1353
    %v1363 = vshrl.u32 2102212464, %v1354
    %v1364 = vor.u32 %v1362, %v1363
    %v1365 = vshll.u32 2102212464, %v1353
    %v1366 = vshrl.u32 920167782, %v1354
    %v1367 = vor.u32 %v1365, %v1366
    %v1368 = vshll.u32 920167782, %v1353
    %v1369 = vshrl.u32 1326507024, %v1354
    %v1370 = vor.u32 %v1368, %v1369
    %vm1371 = vcmp.lt.s32.totalorder %v1352, 1
    %vm1372 = vcmp.lt.s32.totalorder %v1352, 2
    %vm1373 = vcmp.lt.s32.totalorder %v1352, 3
    %vm1374 = vcmp.lt.s32.totalorder %v1352, 4
    %v1375 = vsel %vm1371, %v1355, %v1358
    %v1376 = vsel %vm1374, %v1364, 2102212464
    %v1377 = vsel %vm1373, %v1361, %v1376
    %v1378 = vsel %vm1372, %v1375, %v1377
    %v1379 = vsel %vm1371, %v1358, %v1361
    %v1380 = vsel %vm1374, %v1367, 920167782
    %v1381 = vsel %vm1373, %v1364, %v1380
    %v1382 = vsel %vm1372, %v1379, %v1381
    %v1383 = vsel %vm1371, %v1361, %v1364
    %v1384 = vsel %vm1374, %v1370, 1326507024
    %v1385 = vsel %vm1373, %v1367, %v1384
    %v1386 = vsel %vm1372, %v1383, %v1385
    %v1387 = vshll.u32 %v1347, 8
    %v1388 = vmul.u32.u64.compose %v1387, %v1386
    %v1389 = vextract.low.u32 %v1388
    %v1390 = vextract.high.u32 %v1388
    %v1391 = vmul.u32.u64.compose %v1387, %v1382
    %v1392 = vextract.low.u32 %v1391
    %v1393 = vextract.high.u32 %v1391
    %v1394 = vmul.u32 %v1387, %v1378
    %v1395 = vadd.s32 %v1390, %v1392
    %vm1396 = vc.u32 %v1390, %v1392
    %v1397 = vadd.s32 %v1393, 1
    %v1398 = vsel %vm1396, %v1397, %v1393
    %v1399 = vadd.s32 %v1394, %v1398
    %v1400 = vadd.s32 %v1399, 536870912
    %v1401 = vshrl.u32 %v1400, 30
    %v1402 = vshll.u32 %v1401, 30
    %v1403 = vsub.s32 %v1399, %v1402
    %vm1404 = vcmp.lt.s32.totalorder %v1403, 0
    %v1405 = vsub.s32 0, %v1403
    %v1406 = vsel %vm1404, %v1405, %v1403
    %v1407 = vclz %v1406
    %v1408 = vsub.s32 %v1407, 2
    %vm1409 = vcmp.gt.s32.totalorder 0, %v1408
    %v1410 = vsel %vm1409, 0, %v1408
    %v1411 = vsub.s32 32, %v1410
    %v1412 = vshll.u32 %v1403, %v1410
    %v1413 = vshrl.u32 %v1395, %v1411
    %v1414 = vor.u32 %v1412, %v1413
    %v1415 = vsub.s32 4294967266, %v1410
    %v1416 = vadd.s32 %v1415, 127
    %v1417 = vshll.u32 %v1416, 23
    %v1418 = vor.u32 4788187, %v1417
    %v1419 = vand.u32 2147483647, %v1418
    %v1421 = vcvt.s32.f32 %v1414
    %v1422 = vmul.f32 %v1421, %v1419
    %v1423 = vxor.u32 %v1422, 2147483648
    %v1424 = vsel %vm1341, %v1423, %v1422
    %v1425 = vsub.s32 4, %v1401
    %v1426 = vsel %vm1341, %v1425, %v1401
    %v1427 = vsel %vm1340, %v190, %v1424
    %v1428 = vsel %vm1340, 0, %v1426
    %v1429 = vcosq.f32.pop %v1427
    %v1430 = vsinq.f32.pop %v1427
    %vm1431 = vweird.f32 %v190
    %v1432 = vadd.s32 %v1428, 3
    %v1433 = vand.u32 %v1432, 3
    %vm1434 = vcmp.lt.s32.totalorder %v1433, 2
    %vm1435 = vcmp.eq.s32.totalorder %v1433, 0
    %v1436 = vxor.u32 %v1430, 2147483648
    %v1437 = vsel %vm1435, %v1429, %v1436
    %vm1438 = vcmp.eq.s32.totalorder %v1433, 2
    %v1439 = vxor.u32 %v1429, 2147483648
    %v1440 = vsel %vm1438, %v1439, %v1430
    %v1441 = vsel %vm1434, %v1437, %v1440
    %v1442 = vsel %vm1431, nan, %v1441
    %v1443 = vand.u32 2147483647, %v191
    %vm1444 = vcmp.le.f32.partialorder %v1443, 0.7853982
    %vm1445 = vcmp.lt.s32.totalorder %v191, 0
    %v1446 = vand.u32 %v191, 2139095040
    %v1447 = vshrl.u32 %v1446, 23
    %v1448 = vsub.s32 %v1447, 127
    %v1449 = vand.u32 2147483647, %v191
    %v1450 = vand.u32 %v1449, 8388607
    %v1451 = vor.u32 %v1450, 8388608
    %v1452 = vsub.s32 0, %v1451
    %v1453 = vadd.s32 %v1448, 1
    %vm1454 = vcmp.gt.s32.totalorder %v1453, 0
    %v1455 = vsel %vm1454, %v1453, 0
    %v1456 = vshrl.u32 %v1455, 5
    %v1457 = vand.u32 %v1455, 31
    %v1458 = vsub.s32 32, %v1457
    %v1459 = vshrl.u32 683565275, %v1458
    %v1460 = vshll.u32 683565275, %v1457
    %v1461 = vshrl.u32 2475754826, %v1458
    %v1462 = vor.u32 %v1460, %v1461
    %v1463 = vshll.u32 2475754826, %v1457
    %v1464 = vshrl.u32 2131351028, %v1458
    %v1465 = vor.u32 %v1463, %v1464
    %v1466 = vshll.u32 2131351028, %v1457
    %v1467 = vshrl.u32 2102212464, %v1458
    %v1468 = vor.u32 %v1466, %v1467
    %v1469 = vshll.u32 2102212464, %v1457
    %v1470 = vshrl.u32 920167782, %v1458
    %v1471 = vor.u32 %v1469, %v1470
    %v1472 = vshll.u32 920167782, %v1457
    %v1473 = vshrl.u32 1326507024, %v1458
    %v1474 = vor.u32 %v1472, %v1473
    %vm1475 = vcmp.lt.s32.totalorder %v1456, 1
    %vm1476 = vcmp.lt.s32.totalorder %v1456, 2
    %vm1477 = vcmp.lt.s32.totalorder %v1456, 3
    %vm1478 = vcmp.lt.s32.totalorder %v1456, 4
    %v1479 = vsel %vm1475, %v1459, %v1462
    %v1480 = vsel %vm1478, %v1468, 2102212464
    %v1481 = vsel %vm1477, %v1465, %v1480
    %v1482 = vsel %vm1476, %v1479, %v1481
    %v1483 = vsel %vm1475, %v1462, %v1465
    %v1484 = vsel %vm1478, %v1471, 920167782
    %v1485 = vsel %vm1477, %v1468, %v1484
    %v1486 = vsel %vm1476, %v1483, %v1485
    %v1487 = vsel %vm1475, %v1465, %v1468
    %v1488 = vsel %vm1478, %v1474, 1326507024
    %v1489 = vsel %vm1477, %v1471, %v1488
    %v1490 = vsel %vm1476, %v1487, %v1489
    %v1491 = vshll.u32 %v1451, 8
    %v1492 = vmul.u32.u64.compose %v1491, %v1490
    %v1493 = vextract.low.u32 %v1492
    %v1494 = vextract.high.u32 %v1492
    %v1495 = vmul.u32.u64.compose %v1491, %v1486
    %v1496 = vextract.low.u32 %v1495
    %v1497 = vextract.high.u32 %v1495
    %v1498 = vmul.u32 %v1491, %v1482
    %v1499 = vadd.s32 %v1494, %v1496
    %vm1500 = vc.u32 %v1494, %v1496
    %v1501 = vadd.s32 %v1497, 1
    %v1502 = vsel %vm1500, %v1501, %v1497
    %v1503 = vadd.s32 %v1498, %v1502
    %v1504 = vadd.s32 %v1503, 536870912
    %v1505 = vshrl.u32 %v1504, 30
    %v1506 = vshll.u32 %v1505, 30
    %v1507 = vsub.s32 %v1503, %v1506
    %vm1508 = vcmp.lt.s32.totalorder %v1507, 0
    %v1509 = vsub.s32 0, %v1507
    %v1510 = vsel %vm1508, %v1509, %v1507
    %v1511 = vclz %v1510
    %v1512 = vsub.s32 %v1511, 2
    %vm1513 = vcmp.gt.s32.totalorder 0, %v1512
    %v1514 = vsel %vm1513, 0, %v1512
    %v1515 = vsub.s32 32, %v1514
    %v1516 = vshll.u32 %v1507, %v1514
    %v1517 = vshrl.u32 %v1499, %v1515
    %v1518 = vor.u32 %v1516, %v1517
    %v1519 = vsub.s32 4294967266, %v1514
    %v1520 = vadd.s32 %v1519, 127
    %v1521 = vshll.u32 %v1520, 23
    %v1522 = vor.u32 4788187, %v1521
    %v1523 = vand.u32 2147483647, %v1522
    %v1525 = vcvt.s32.f32 %v1518
    %v1526 = vmul.f32 %v1525, %v1523
    %v1527 = vxor.u32 %v1526, 2147483648
    %v1528 = vsel %vm1445, %v1527, %v1526
    %v1529 = vsub.s32 4, %v1505
    %v1530 = vsel %vm1445, %v1529, %v1505
    %v1531 = vsel %vm1444, %v191, %v1528
    %v1532 = vsel %vm1444, 0, %v1530
    %v1533 = vcosq.f32.pop %v1531
    %v1534 = vsinq.f32.pop %v1531
    %vm1535 = vweird.f32 %v191
    %v1536 = vadd.s32 %v1532, 3
    %v1537 = vand.u32 %v1536, 3
    %vm1538 = vcmp.lt.s32.totalorder %v1537, 2
    %vm1539 = vcmp.eq.s32.totalorder %v1537, 0
    %v1540 = vxor.u32 %v1534, 2147483648
    %v1541 = vsel %vm1539, %v1533, %v1540
    %vm1542 = vcmp.eq.s32.totalorder %v1537, 2
    %v1543 = vxor.u32 %v1533, 2147483648
    %v1544 = vsel %vm1542, %v1543, %v1534
    %v1545 = vsel %vm1538, %v1541, %v1544
    %v1546 = vsel %vm1535, nan, %v1545
    %v1547 = vand.u32 2147483647, %v192
    %vm1548 = vcmp.le.f32.partialorder %v1547, 0.7853982
    %vm1549 = vcmp.lt.s32.totalorder %v192, 0
    %v1550 = vand.u32 %v192, 2139095040
    %v1551 = vshrl.u32 %v1550, 23
    %v1552 = vsub.s32 %v1551, 127
    %v1553 = vand.u32 2147483647, %v192
    %v1554 = vand.u32 %v1553, 8388607
    %v1555 = vor.u32 %v1554, 8388608
    %v1556 = vsub.s32 0, %v1555
    %v1557 = vadd.s32 %v1552, 1
    %vm1558 = vcmp.gt.s32.totalorder %v1557, 0
    %v1559 = vsel %vm1558, %v1557, 0
    %v1560 = vshrl.u32 %v1559, 5
    %v1561 = vand.u32 %v1559, 31
    %v1562 = vsub.s32 32, %v1561
    %v1563 = vshrl.u32 683565275, %v1562
    %v1564 = vshll.u32 683565275, %v1561
    %v1565 = vshrl.u32 2475754826, %v1562
    %v1566 = vor.u32 %v1564, %v1565
    %v1567 = vshll.u32 2475754826, %v1561
    %v1568 = vshrl.u32 2131351028, %v1562
    %v1569 = vor.u32 %v1567, %v1568
    %v1570 = vshll.u32 2131351028, %v1561
    %v1571 = vshrl.u32 2102212464, %v1562
    %v1572 = vor.u32 %v1570, %v1571
    %v1573 = vshll.u32 2102212464, %v1561
    %v1574 = vshrl.u32 920167782, %v1562
    %v1575 = vor.u32 %v1573, %v1574
    %v1576 = vshll.u32 920167782, %v1561
    %v1577 = vshrl.u32 1326507024, %v1562
    %v1578 = vor.u32 %v1576, %v1577
    %vm1579 = vcmp.lt.s32.totalorder %v1560, 1
    %vm1580 = vcmp.lt.s32.totalorder %v1560, 2
    %vm1581 = vcmp.lt.s32.totalorder %v1560, 3
    %vm1582 = vcmp.lt.s32.totalorder %v1560, 4
    %v1583 = vsel %vm1579, %v1563, %v1566
    %v1584 = vsel %vm1582, %v1572, 2102212464
    %v1585 = vsel %vm1581, %v1569, %v1584
    %v1586 = vsel %vm1580, %v1583, %v1585
    %v1587 = vsel %vm1579, %v1566, %v1569
    %v1588 = vsel %vm1582, %v1575, 920167782
    %v1589 = vsel %vm1581, %v1572, %v1588
    %v1590 = vsel %vm1580, %v1587, %v1589
    %v1591 = vsel %vm1579, %v1569, %v1572
    %v1592 = vsel %vm1582, %v1578, 1326507024
    %v1593 = vsel %vm1581, %v1575, %v1592
    %v1594 = vsel %vm1580, %v1591, %v1593
    %v1595 = vshll.u32 %v1555, 8
    %v1596 = vmul.u32.u64.compose %v1595, %v1594
    %v1597 = vextract.low.u32 %v1596
    %v1598 = vextract.high.u32 %v1596
    %v1599 = vmul.u32.u64.compose %v1595, %v1590
    %v1600 = vextract.low.u32 %v1599
    %v1601 = vextract.high.u32 %v1599
    %v1602 = vmul.u32 %v1595, %v1586
    %v1603 = vadd.s32 %v1598, %v1600
    %vm1604 = vc.u32 %v1598, %v1600
    %v1605 = vadd.s32 %v1601, 1
    %v1606 = vsel %vm1604, %v1605, %v1601
    %v1607 = vadd.s32 %v1602, %v1606
    %v1608 = vadd.s32 %v1607, 536870912
    %v1609 = vshrl.u32 %v1608, 30
    %v1610 = vshll.u32 %v1609, 30
    %v1611 = vsub.s32 %v1607, %v1610
    %vm1612 = vcmp.lt.s32.totalorder %v1611, 0
    %v1613 = vsub.s32 0, %v1611
    %v1614 = vsel %vm1612, %v1613, %v1611
    %v1615 = vclz %v1614
    %v1616 = vsub.s32 %v1615, 2
    %vm1617 = vcmp.gt.s32.totalorder 0, %v1616
    %v1618 = vsel %vm1617, 0, %v1616
    %v1619 = vsub.s32 32, %v1618
    %v1620 = vshll.u32 %v1611, %v1618
    %v1621 = vshrl.u32 %v1603, %v1619
    %v1622 = vor.u32 %v1620, %v1621
    %v1623 = vsub.s32 4294967266, %v1618
    %v1624 = vadd.s32 %v1623, 127
    %v1625 = vshll.u32 %v1624, 23
    %v1626 = vor.u32 4788187, %v1625
    %v1627 = vand.u32 2147483647, %v1626
    %v1629 = vcvt.s32.f32 %v1622
    %v1630 = vmul.f32 %v1629, %v1627
    %v1631 = vxor.u32 %v1630, 2147483648
    %v1632 = vsel %vm1549, %v1631, %v1630
    %v1633 = vsub.s32 4, %v1609
    %v1634 = vsel %vm1549, %v1633, %v1609
    %v1635 = vsel %vm1548, %v192, %v1632
    %v1636 = vsel %vm1548, 0, %v1634
    %v1637 = vcosq.f32.pop %v1635
    %v1638 = vsinq.f32.pop %v1635
    %vm1639 = vweird.f32 %v192
    %v1640 = vadd.s32 %v1636, 3
    %v1641 = vand.u32 %v1640, 3
    %vm1642 = vcmp.lt.s32.totalorder %v1641, 2
    %vm1643 = vcmp.eq.s32.totalorder %v1641, 0
    %v1644 = vxor.u32 %v1638, 2147483648
    %v1645 = vsel %vm1643, %v1637, %v1644
    %vm1646 = vcmp.eq.s32.totalorder %v1641, 2
    %v1647 = vxor.u32 %v1637, 2147483648
    %v1648 = vsel %vm1646, %v1647, %v1638
    %v1649 = vsel %vm1642, %v1645, %v1648
    %v1650 = vsel %vm1639, nan, %v1649
    %v1651 = vand.u32 2147483647, %v193
    %vm1652 = vcmp.le.f32.partialorder %v1651, 0.7853982
    %vm1653 = vcmp.lt.s32.totalorder %v193, 0
    %v1654 = vand.u32 %v193, 2139095040
    %v1655 = vshrl.u32 %v1654, 23
    %v1656 = vsub.s32 %v1655, 127
    %v1657 = vand.u32 2147483647, %v193
    %v1658 = vand.u32 %v1657, 8388607
    %v1659 = vor.u32 %v1658, 8388608
    %v1660 = vsub.s32 0, %v1659
    %v1661 = vadd.s32 %v1656, 1
    %vm1662 = vcmp.gt.s32.totalorder %v1661, 0
    %v1663 = vsel %vm1662, %v1661, 0
    %v1664 = vshrl.u32 %v1663, 5
    %v1665 = vand.u32 %v1663, 31
    %v1666 = vsub.s32 32, %v1665
    %v1667 = vshrl.u32 683565275, %v1666
    %v1668 = vshll.u32 683565275, %v1665
    %v1669 = vshrl.u32 2475754826, %v1666
    %v1670 = vor.u32 %v1668, %v1669
    %v1671 = vshll.u32 2475754826, %v1665
    %v1672 = vshrl.u32 2131351028, %v1666
    %v1673 = vor.u32 %v1671, %v1672
    %v1674 = vshll.u32 2131351028, %v1665
    %v1675 = vshrl.u32 2102212464, %v1666
    %v1676 = vor.u32 %v1674, %v1675
    %v1677 = vshll.u32 2102212464, %v1665
    %v1678 = vshrl.u32 920167782, %v1666
    %v1679 = vor.u32 %v1677, %v1678
    %v1680 = vshll.u32 920167782, %v1665
    %v1681 = vshrl.u32 1326507024, %v1666
    %v1682 = vor.u32 %v1680, %v1681
    %vm1683 = vcmp.lt.s32.totalorder %v1664, 1
    %vm1684 = vcmp.lt.s32.totalorder %v1664, 2
    %vm1685 = vcmp.lt.s32.totalorder %v1664, 3
    %vm1686 = vcmp.lt.s32.totalorder %v1664, 4
    %v1687 = vsel %vm1683, %v1667, %v1670
    %v1688 = vsel %vm1686, %v1676, 2102212464
    %v1689 = vsel %vm1685, %v1673, %v1688
    %v1690 = vsel %vm1684, %v1687, %v1689
    %v1691 = vsel %vm1683, %v1670, %v1673
    %v1692 = vsel %vm1686, %v1679, 920167782
    %v1693 = vsel %vm1685, %v1676, %v1692
    %v1694 = vsel %vm1684, %v1691, %v1693
    %v1695 = vsel %vm1683, %v1673, %v1676
    %v1696 = vsel %vm1686, %v1682, 1326507024
    %v1697 = vsel %vm1685, %v1679, %v1696
    %v1698 = vsel %vm1684, %v1695, %v1697
    %v1699 = vshll.u32 %v1659, 8
    %v1700 = vmul.u32.u64.compose %v1699, %v1698
    %v1701 = vextract.low.u32 %v1700
    %v1702 = vextract.high.u32 %v1700
    %v1703 = vmul.u32.u64.compose %v1699, %v1694
    %v1704 = vextract.low.u32 %v1703
    %v1705 = vextract.high.u32 %v1703
    %v1706 = vmul.u32 %v1699, %v1690
    %v1707 = vadd.s32 %v1702, %v1704
    %vm1708 = vc.u32 %v1702, %v1704
    %v1709 = vadd.s32 %v1705, 1
    %v1710 = vsel %vm1708, %v1709, %v1705
    %v1711 = vadd.s32 %v1706, %v1710
    %v1712 = vadd.s32 %v1711, 536870912
    %v1713 = vshrl.u32 %v1712, 30
    %v1714 = vshll.u32 %v1713, 30
    %v1715 = vsub.s32 %v1711, %v1714
    %vm1716 = vcmp.lt.s32.totalorder %v1715, 0
    %v1717 = vsub.s32 0, %v1715
    %v1718 = vsel %vm1716, %v1717, %v1715
    %v1719 = vclz %v1718
    %v1720 = vsub.s32 %v1719, 2
    %vm1721 = vcmp.gt.s32.totalorder 0, %v1720
    %v1722 = vsel %vm1721, 0, %v1720
    %v1723 = vsub.s32 32, %v1722
    %v1724 = vshll.u32 %v1715, %v1722
    %v1725 = vshrl.u32 %v1707, %v1723
    %v1726 = vor.u32 %v1724, %v1725
    %v1727 = vsub.s32 4294967266, %v1722
    %v1728 = vadd.s32 %v1727, 127
    %v1729 = vshll.u32 %v1728, 23
    %v1730 = vor.u32 4788187, %v1729
    %v1731 = vand.u32 2147483647, %v1730
    %v1733 = vcvt.s32.f32 %v1726
    %v1734 = vmul.f32 %v1733, %v1731
    %v1735 = vxor.u32 %v1734, 2147483648
    %v1736 = vsel %vm1653, %v1735, %v1734
    %v1737 = vsub.s32 4, %v1713
    %v1738 = vsel %vm1653, %v1737, %v1713
    %v1739 = vsel %vm1652, %v193, %v1736
    %v1740 = vsel %vm1652, 0, %v1738
    %v1741 = vcosq.f32.pop %v1739
    %v1742 = vsinq.f32.pop %v1739
    %vm1743 = vweird.f32 %v193
    %v1744 = vadd.s32 %v1740, 3
    %v1745 = vand.u32 %v1744, 3
    %vm1746 = vcmp.lt.s32.totalorder %v1745, 2
    %vm1747 = vcmp.eq.s32.totalorder %v1745, 0
    %v1748 = vxor.u32 %v1742, 2147483648
    %v1749 = vsel %vm1747, %v1741, %v1748
    %vm1750 = vcmp.eq.s32.totalorder %v1745, 2
    %v1751 = vxor.u32 %v1741, 2147483648
    %v1752 = vsel %vm1750, %v1751, %v1742
    %v1753 = vsel %vm1746, %v1749, %v1752
    %v1754 = vsel %vm1743, nan, %v1753
    %v1755 = vand.u32 2147483647, %v194
    %vm1756 = vcmp.le.f32.partialorder %v1755, 0.7853982
    %vm1757 = vcmp.lt.s32.totalorder %v194, 0
    %v1758 = vand.u32 %v194, 2139095040
    %v1759 = vshrl.u32 %v1758, 23
    %v1760 = vsub.s32 %v1759, 127
    %v1761 = vand.u32 2147483647, %v194
    %v1762 = vand.u32 %v1761, 8388607
    %v1763 = vor.u32 %v1762, 8388608
    %v1764 = vsub.s32 0, %v1763
    %v1765 = vadd.s32 %v1760, 1
    %vm1766 = vcmp.gt.s32.totalorder %v1765, 0
    %v1767 = vsel %vm1766, %v1765, 0
    %v1768 = vshrl.u32 %v1767, 5
    %v1769 = vand.u32 %v1767, 31
    %v1770 = vsub.s32 32, %v1769
    %v1771 = vshrl.u32 683565275, %v1770
    %v1772 = vshll.u32 683565275, %v1769
    %v1773 = vshrl.u32 2475754826, %v1770
    %v1774 = vor.u32 %v1772, %v1773
    %v1775 = vshll.u32 2475754826, %v1769
    %v1776 = vshrl.u32 2131351028, %v1770
    %v1777 = vor.u32 %v1775, %v1776
    %v1778 = vshll.u32 2131351028, %v1769
    %v1779 = vshrl.u32 2102212464, %v1770
    %v1780 = vor.u32 %v1778, %v1779
    %v1781 = vshll.u32 2102212464, %v1769
    %v1782 = vshrl.u32 920167782, %v1770
    %v1783 = vor.u32 %v1781, %v1782
    %v1784 = vshll.u32 920167782, %v1769
    %v1785 = vshrl.u32 1326507024, %v1770
    %v1786 = vor.u32 %v1784, %v1785
    %vm1787 = vcmp.lt.s32.totalorder %v1768, 1
    %vm1788 = vcmp.lt.s32.totalorder %v1768, 2
    %vm1789 = vcmp.lt.s32.totalorder %v1768, 3
    %vm1790 = vcmp.lt.s32.totalorder %v1768, 4
    %v1791 = vsel %vm1787, %v1771, %v1774
    %v1792 = vsel %vm1790, %v1780, 2102212464
    %v1793 = vsel %vm1789, %v1777, %v1792
    %v1794 = vsel %vm1788, %v1791, %v1793
    %v1795 = vsel %vm1787, %v1774, %v1777
    %v1796 = vsel %vm1790, %v1783, 920167782
    %v1797 = vsel %vm1789, %v1780, %v1796
    %v1798 = vsel %vm1788, %v1795, %v1797
    %v1799 = vsel %vm1787, %v1777, %v1780
    %v1800 = vsel %vm1790, %v1786, 1326507024
    %v1801 = vsel %vm1789, %v1783, %v1800
    %v1802 = vsel %vm1788, %v1799, %v1801
    %v1803 = vshll.u32 %v1763, 8
    %v1804 = vmul.u32.u64.compose %v1803, %v1802
    %v1805 = vextract.low.u32 %v1804
    %v1806 = vextract.high.u32 %v1804
    %v1807 = vmul.u32.u64.compose %v1803, %v1798
    %v1808 = vextract.low.u32 %v1807
    %v1809 = vextract.high.u32 %v1807
    %v1810 = vmul.u32 %v1803, %v1794
    %v1811 = vadd.s32 %v1806, %v1808
    %vm1812 = vc.u32 %v1806, %v1808
    %v1813 = vadd.s32 %v1809, 1
    %v1814 = vsel %vm1812, %v1813, %v1809
    %v1815 = vadd.s32 %v1810, %v1814
    %v1816 = vadd.s32 %v1815, 536870912
    %v1817 = vshrl.u32 %v1816, 30
    %v1818 = vshll.u32 %v1817, 30
    %v1819 = vsub.s32 %v1815, %v1818
    %vm1820 = vcmp.lt.s32.totalorder %v1819, 0
    %v1821 = vsub.s32 0, %v1819
    %v1822 = vsel %vm1820, %v1821, %v1819
    %v1823 = vclz %v1822
    %v1824 = vsub.s32 %v1823, 2
    %vm1825 = vcmp.gt.s32.totalorder 0, %v1824
    %v1826 = vsel %vm1825, 0, %v1824
    %v1827 = vsub.s32 32, %v1826
    %v1828 = vshll.u32 %v1819, %v1826
    %v1829 = vshrl.u32 %v1811, %v1827
    %v1830 = vor.u32 %v1828, %v1829
    %v1831 = vsub.s32 4294967266, %v1826
    %v1832 = vadd.s32 %v1831, 127
    %v1833 = vshll.u32 %v1832, 23
    %v1834 = vor.u32 4788187, %v1833
    %v1835 = vand.u32 2147483647, %v1834
    %v1837 = vcvt.s32.f32 %v1830
    %v1838 = vmul.f32 %v1837, %v1835
    %v1839 = vxor.u32 %v1838, 2147483648
    %v1840 = vsel %vm1757, %v1839, %v1838
    %v1841 = vsub.s32 4, %v1817
    %v1842 = vsel %vm1757, %v1841, %v1817
    %v1843 = vsel %vm1756, %v194, %v1840
    %v1844 = vsel %vm1756, 0, %v1842
    %v1845 = vcosq.f32.pop %v1843
    %v1846 = vsinq.f32.pop %v1843
    %vm1847 = vweird.f32 %v194
    %v1848 = vadd.s32 %v1844, 3
    %v1849 = vand.u32 %v1848, 3
    %vm1850 = vcmp.lt.s32.totalorder %v1849, 2
    %vm1851 = vcmp.eq.s32.totalorder %v1849, 0
    %v1852 = vxor.u32 %v1846, 2147483648
    %v1853 = vsel %vm1851, %v1845, %v1852
    %vm1854 = vcmp.eq.s32.totalorder %v1849, 2
    %v1855 = vxor.u32 %v1845, 2147483648
    %v1856 = vsel %vm1854, %v1855, %v1846
    %v1857 = vsel %vm1850, %v1853, %v1856
    %v1858 = vsel %vm1847, nan, %v1857
    %v1859 = vadd.f32 %v298, %v51
    %v1860 = vadd.f32 %v402, %v52
    %v1861 = vadd.f32 %v506, %v53
    %v1862 = vadd.f32 %v610, %v54
    %v1863 = vadd.f32 %v714, %v55
    %v1864 = vadd.f32 %v818, %v56
    %v1865 = vadd.f32 %v922, %v57
    %v1866 = vadd.f32 %v1026, %v58
    %v1867 = vadd.f32 %v1130, %v59
    %v1868 = vadd.f32 %v1234, %v60
    %v1869 = vadd.f32 %v1338, %v61
    %v1870 = vadd.f32 %v1442, %v62
    %v1871 = vadd.f32 %v1546, %v63
    %v1872 = vadd.f32 %v1650, %v64
    %v1873 = vadd.f32 %v1754, %v65
    %v1874 = vadd.f32 %v1858, %v66
    %v1875 = vld [vmem:[%s2] sm:$0xff]
    %v1876 = vld [vmem:[%s2 + $0x8] sm:$0xff]
    %v1877 = vld [vmem:[%s2 + $0x10] sm:$0xff]
    %v1878 = vlaneseq
    %v1879 = vshrl.u32 %v1878, 7
    %v1880 = vsub.s32 0, %v1879
    %v1881 = vrot.slane %v69, %v1880
    %vm1882 = vcmask 195584
    %v1884 = vsel %vm1882, %v1859, 0
    %v1887 = vsel %vm1882, %v1860, 0
    %v1890 = vsel %vm1882, %v1861, 0
    %v1893 = vsel %vm1882, %v1862, 0
    %v1896 = vsel %vm1882, %v1863, 0
    %v1899 = vsel %vm1882, %v1864, 0
    %v1902 = vsel %vm1882, %v1865, 0
    %v1905 = vsel %vm1882, %v1866, 0
    %v1908 = vsel %vm1882, %v1867, 0
    %v1911 = vsel %vm1882, %v1868, 0
    %v1914 = vsel %vm1882, %v1869, 0
    %v1917 = vsel %vm1882, %v1870, 0
    %v1920 = vsel %vm1882, %v1871, 0
    %v1923 = vsel %vm1882, %v1872, 0
    %v1926 = vsel %vm1882, %v1873, 0
    %v1929 = vsel %vm1882, %v1874, 0
    %1931 = vmatprep.subr.mxu0 0.0
    %1932 = vmatpush1.msra.mxu0 0.0
    %1933 = vmatprep.subr.mxu0 0.0
    %1934 = vmatpush1.msra.mxu0 0.0
    %1935 = vmatprep.subr.mxu0 0.0
    %1936 = vmatpush1.msra.mxu0 0.0
    %1937 = vmatprep.subr.mxu0 0.0
    %1938 = vmatpush1.msra.mxu0 0.0
    %1939 = vmatprep.subr.mxu0 0.0
    %1940 = vmatpush1.msra.mxu0 0.0
    %1941 = vmatprep.subr.mxu0 0.0
    %1942 = vmatpush1.msra.mxu0 0.0
    %1943 = vmatprep.subr.mxu0 0.0
    %1944 = vmatpush1.msra.mxu0 0.0
    %1945 = vmatprep.subr.mxu0 0.0
    %1946 = vmatpush1.msra.mxu0 0.0
    %1947 = vmatprep.subr.mxu0 0.0
    %1948 = vmatpush1.msra.mxu0 0.0
    %1949 = vmatprep.subr.mxu0 0.0
    %1950 = vmatpush1.msra.mxu0 0.0
    %1951 = vmatprep.subr.mxu0 0.0
    %1952 = vmatpush1.msra.mxu0 0.0
    %1953 = vmatprep.subr.mxu0 0.0
    %1954 = vmatpush1.msra.mxu0 0.0
    %1955 = vmatprep.subr.mxu0 0.0
    %1956 = vmatpush1.msra.mxu0 0.0
    %1957 = vmatprep.subr.mxu0 0.0
    %1958 = vmatpush1.msra.mxu0 %v1877
    %1959 = vmatprep.subr.mxu0 0.0
    %1960 = vmatpush1.msra.mxu0 %v1876
    %1961 = vmatprep.subr.mxu0 0.0
    %1962 = vmatpush1.msra.mxu0 %v1875
    %1963 = vmatprep.subr.mxu0 0.0
    %1964 = vmatpush2.msra.mxu0 0.0
    %1965 = vmatprep.subr.mxu0 0.0
    %1966 = vmatpush2.msra.mxu0 0.0
    %1967 = vmatprep.subr.mxu0 0.0
    %1968 = vmatpush2.msra.mxu0 0.0
    %1969 = vmatprep.subr.mxu0 0.0
    %1970 = vmatpush2.msra.mxu0 0.0
    %1971 = vmatprep.subr.mxu0 0.0
    %1972 = vmatpush2.msra.mxu0 0.0
    %1973 = vmatprep.subr.mxu0 0.0
    %1974 = vmatpush2.msra.mxu0 0.0
    %1975 = vmatprep.subr.mxu0 0.0
    %1976 = vmatpush2.msra.mxu0 0.0
    %1977 = vmatprep.subr.mxu0 0.0
    %1978 = vmatpush2.msra.mxu0 0.0
    %1979 = vmatprep.subr.mxu0 0.0
    %1980 = vmatpush2.msra.mxu0 0.0
    %1981 = vmatprep.subr.mxu0 0.0
    %1982 = vmatpush2.msra.mxu0 0.0
    %1983 = vmatprep.subr.mxu0 0.0
    %1984 = vmatpush2.msra.mxu0 0.0
    %1985 = vmatprep.subr.mxu0 0.0
    %1986 = vmatpush2.msra.mxu0 0.0
    %1987 = vmatprep.subr.mxu0 0.0
    %1988 = vmatpush2.msra.mxu0 0.0
    %1989 = vmatprep.subr.mxu0 0.0
    %1990 = vmatpush2.msra.mxu0 0.0
    %1991 = vmatprep.subr.mxu0 0.0
    %1992 = vmatpush2.msra.mxu0 0.0
    %1993 = vmatprep.subr.mxu0 0.0
    %1994 = vmatpush2.msra.mxu0 0.0
    %1995 = vmatprep.mubr.f32.mxu0 0.0
    %1996 = vmatmul.mubr.f32.gmra.mxu0 %v1884
    %v1997 = vpop.f32.mrf.mxu0
    %v1998 = vadd.f32 %v1881, %v1997
    %v1999 = vpop.f32.mrf.mxu0
    %2000 = vmatprep.mubr.f32.mxu0 0.0
    %2001 = vmatmul.mubr.f32.gmra.mxu0 %v1887
    %v2002 = vpop.f32.mrf.mxu0
    %v2003 = vadd.f32 %v1881, %v2002
    %v2004 = vpop.f32.mrf.mxu0
    %2005 = vmatprep.mubr.f32.mxu0 0.0
    %2006 = vmatmul.mubr.f32.gmra.mxu0 %v1890
    %v2007 = vpop.f32.mrf.mxu0
    %v2008 = vadd.f32 %v1881, %v2007
    %v2009 = vpop.f32.mrf.mxu0
    %2010 = vmatprep.mubr.f32.mxu0 0.0
    %2011 = vmatmul.mubr.f32.gmra.mxu0 %v1893
    %v2012 = vpop.f32.mrf.mxu0
    %v2013 = vadd.f32 %v1881, %v2012
    %v2014 = vpop.f32.mrf.mxu0
    %2015 = vmatprep.mubr.f32.mxu0 0.0
    %2016 = vmatmul.mubr.f32.gmra.mxu0 %v1896
    %v2017 = vpop.f32.mrf.mxu0
    %v2018 = vadd.f32 %v1881, %v2017
    %v2019 = vpop.f32.mrf.mxu0
    %2020 = vmatprep.mubr.f32.mxu0 0.0
    %2021 = vmatmul.mubr.f32.gmra.mxu0 %v1899
    %v2022 = vpop.f32.mrf.mxu0
    %v2023 = vadd.f32 %v1881, %v2022
    %v2024 = vpop.f32.mrf.mxu0
    %2025 = vmatprep.mubr.f32.mxu0 0.0
    %2026 = vmatmul.mubr.f32.gmra.mxu0 %v1902
    %v2027 = vpop.f32.mrf.mxu0
    %v2028 = vadd.f32 %v1881, %v2027
    %v2029 = vpop.f32.mrf.mxu0
    %2030 = vmatprep.mubr.f32.mxu0 0.0
    %2031 = vmatmul.mubr.f32.gmra.mxu0 %v1905
    %v2032 = vpop.f32.mrf.mxu0
    %v2033 = vadd.f32 %v1881, %v2032
    %v2034 = vpop.f32.mrf.mxu0
    %2035 = vmatprep.mubr.f32.mxu0 0.0
    %2036 = vmatmul.mubr.f32.gmra.mxu0 %v1908
    %v2037 = vpop.f32.mrf.mxu0
    %v2038 = vadd.f32 %v1881, %v2037
    %v2039 = vpop.f32.mrf.mxu0
    %2040 = vmatprep.mubr.f32.mxu0 0.0
    %2041 = vmatmul.mubr.f32.gmra.mxu0 %v1911
    %v2042 = vpop.f32.mrf.mxu0
    %v2043 = vadd.f32 %v1881, %v2042
    %v2044 = vpop.f32.mrf.mxu0
    %2045 = vmatprep.mubr.f32.mxu0 0.0
    %2046 = vmatmul.mubr.f32.gmra.mxu0 %v1914
    %v2047 = vpop.f32.mrf.mxu0
    %v2048 = vadd.f32 %v1881, %v2047
    %v2049 = vpop.f32.mrf.mxu0
    %2050 = vmatprep.mubr.f32.mxu0 0.0
    %2051 = vmatmul.mubr.f32.gmra.mxu0 %v1917
    %v2052 = vpop.f32.mrf.mxu0
    %v2053 = vadd.f32 %v1881, %v2052
    %v2054 = vpop.f32.mrf.mxu0
    %2055 = vmatprep.mubr.f32.mxu0 0.0
    %2056 = vmatmul.mubr.f32.gmra.mxu0 %v1920
    %v2057 = vpop.f32.mrf.mxu0
    %v2058 = vadd.f32 %v1881, %v2057
    %v2059 = vpop.f32.mrf.mxu0
    %2060 = vmatprep.mubr.f32.mxu0 0.0
    %2061 = vmatmul.mubr.f32.gmra.mxu0 %v1923
    %v2062 = vpop.f32.mrf.mxu0
    %v2063 = vadd.f32 %v1881, %v2062
    %v2064 = vpop.f32.mrf.mxu0
    %2065 = vmatprep.mubr.f32.mxu0 0.0
    %2066 = vmatmul.mubr.f32.gmra.mxu0 %v1926
    %v2067 = vpop.f32.mrf.mxu0
    %v2068 = vadd.f32 %v1881, %v2067
    %v2069 = vpop.f32.mrf.mxu0
    %2070 = vmatprep.mubr.f32.mxu0 0.0
    %2071 = vmatmul.mubr.f32.gmra.mxu0 %v1929
    %v2072 = vpop.f32.mrf.mxu0
    %v2073 = vadd.f32 %v1881, %v2072
    %v2074 = vpop.f32.mrf.mxu0
    %2075 = vdwg.mxu0
    %v2076 = vmul.f32 %v1998, 0.01
    %v2077 = vmul.f32 %v2003, 0.01
    %v2078 = vmul.f32 %v2008, 0.01
    %v2079 = vmul.f32 %v2013, 0.01
    %v2080 = vmul.f32 %v2018, 0.01
    %v2081 = vmul.f32 %v2023, 0.01
    %v2082 = vmul.f32 %v2028, 0.01
    %v2083 = vmul.f32 %v2033, 0.01
    %v2084 = vmul.f32 %v2038, 0.01
    %v2085 = vmul.f32 %v2043, 0.01
    %v2086 = vmul.f32 %v2048, 0.01
    %v2087 = vmul.f32 %v2053, 0.01
    %v2088 = vmul.f32 %v2058, 0.01
    %v2089 = vmul.f32 %v2063, 0.01
    %v2090 = vmul.f32 %v2068, 0.01
    %v2091 = vmul.f32 %v2073, 0.01
    %v2092 = vmax.f32 %v1998, %v2076
    %v2093 = vmax.f32 %v2003, %v2077
    %v2094 = vmax.f32 %v2008, %v2078
    %v2095 = vmax.f32 %v2013, %v2079
    %v2096 = vmax.f32 %v2018, %v2080
    %v2097 = vmax.f32 %v2023, %v2081
    %v2098 = vmax.f32 %v2028, %v2082
    %v2099 = vmax.f32 %v2033, %v2083
    %v2100 = vmax.f32 %v2038, %v2084
    %v2101 = vmax.f32 %v2043, %v2085
    %v2102 = vmax.f32 %v2048, %v2086
    %v2103 = vmax.f32 %v2053, %v2087
    %v2104 = vmax.f32 %v2058, %v2088
    %v2105 = vmax.f32 %v2063, %v2089
    %v2106 = vmax.f32 %v2068, %v2090
    %v2107 = vmax.f32 %v2073, %v2091
    %v2108 = vld [vmem:[#allocation2] sm:$0xff]
    %v2109 = vld [vmem:[#allocation2 + $0x8] sm:$0xff]
    %v2110 = vld [vmem:[#allocation2 + $0x10] sm:$0xff]
    %v2111 = vld [vmem:[#allocation2 + $0x18] sm:$0xff]
    %v2112 = vld [vmem:[#allocation2 + $0x20] sm:$0xff]
    %v2113 = vld [vmem:[#allocation2 + $0x28] sm:$0xff]
    %v2114 = vlaneseq
    %v2115 = vshrl.u32 %v2114, 7
    %v2116 = vsub.s32 0, %v2115
    %v2117 = vrot.slane %v70, %v2116
    %vm2118 = vcmask 392192
    %v2120 = vsel %vm2118, %v2092, 0
    %v2123 = vsel %vm2118, %v2093, 0
    %v2126 = vsel %vm2118, %v2094, 0
    %v2129 = vsel %vm2118, %v2095, 0
    %v2132 = vsel %vm2118, %v2096, 0
    %v2135 = vsel %vm2118, %v2097, 0
    %v2138 = vsel %vm2118, %v2098, 0
    %v2141 = vsel %vm2118, %v2099, 0
    %v2144 = vsel %vm2118, %v2100, 0
    %v2147 = vsel %vm2118, %v2101, 0
    %v2150 = vsel %vm2118, %v2102, 0
    %v2153 = vsel %vm2118, %v2103, 0
    %v2156 = vsel %vm2118, %v2104, 0
    %v2159 = vsel %vm2118, %v2105, 0
    %v2162 = vsel %vm2118, %v2106, 0
    %v2165 = vsel %vm2118, %v2107, 0
    %2167 = vmatprep.subr.mxu0 0.0
    %2168 = vmatpush1.msra.mxu0 0.0
    %2169 = vmatprep.subr.mxu0 0.0
    %2170 = vmatpush1.msra.mxu0 0.0
    %2171 = vmatprep.subr.mxu0 0.0
    %2172 = vmatpush1.msra.mxu0 0.0
    %2173 = vmatprep.subr.mxu0 0.0
    %2174 = vmatpush1.msra.mxu0 0.0
    %2175 = vmatprep.subr.mxu0 0.0
    %2176 = vmatpush1.msra.mxu0 0.0
    %2177 = vmatprep.subr.mxu0 0.0
    %2178 = vmatpush1.msra.mxu0 0.0
    %2179 = vmatprep.subr.mxu0 0.0
    %2180 = vmatpush1.msra.mxu0 0.0
    %2181 = vmatprep.subr.mxu0 0.0
    %2182 = vmatpush1.msra.mxu0 0.0
    %2183 = vmatprep.subr.mxu0 0.0
    %2184 = vmatpush1.msra.mxu0 0.0
    %2185 = vmatprep.subr.mxu0 0.0
    %2186 = vmatpush1.msra.mxu0 0.0
    %2187 = vmatprep.subr.mxu0 0.0
    %2188 = vmatpush1.msra.mxu0 %v2113
    %2189 = vmatprep.subr.mxu0 0.0
    %2190 = vmatpush1.msra.mxu0 %v2112
    %2191 = vmatprep.subr.mxu0 0.0
    %2192 = vmatpush1.msra.mxu0 %v2111
    %2193 = vmatprep.subr.mxu0 0.0
    %2194 = vmatpush1.msra.mxu0 %v2110
    %2195 = vmatprep.subr.mxu0 0.0
    %2196 = vmatpush1.msra.mxu0 %v2109
    %2197 = vmatprep.subr.mxu0 0.0
    %2198 = vmatpush1.msra.mxu0 %v2108
    %2199 = vmatprep.subr.mxu0 0.0
    %2200 = vmatpush2.msra.mxu0 0.0
    %2201 = vmatprep.subr.mxu0 0.0
    %2202 = vmatpush2.msra.mxu0 0.0
    %2203 = vmatprep.subr.mxu0 0.0
    %2204 = vmatpush2.msra.mxu0 0.0
    %2205 = vmatprep.subr.mxu0 0.0
    %2206 = vmatpush2.msra.mxu0 0.0
    %2207 = vmatprep.subr.mxu0 0.0
    %2208 = vmatpush2.msra.mxu0 0.0
    %2209 = vmatprep.subr.mxu0 0.0
    %2210 = vmatpush2.msra.mxu0 0.0
    %2211 = vmatprep.subr.mxu0 0.0
    %2212 = vmatpush2.msra.mxu0 0.0
    %2213 = vmatprep.subr.mxu0 0.0
    %2214 = vmatpush2.msra.mxu0 0.0
    %2215 = vmatprep.subr.mxu0 0.0
    %2216 = vmatpush2.msra.mxu0 0.0
    %2217 = vmatprep.subr.mxu0 0.0
    %2218 = vmatpush2.msra.mxu0 0.0
    %2219 = vmatprep.subr.mxu0 0.0
    %2220 = vmatpush2.msra.mxu0 0.0
    %2221 = vmatprep.subr.mxu0 0.0
    %2222 = vmatpush2.msra.mxu0 0.0
    %2223 = vmatprep.subr.mxu0 0.0
    %2224 = vmatpush2.msra.mxu0 0.0
    %2225 = vmatprep.subr.mxu0 0.0
    %2226 = vmatpush2.msra.mxu0 0.0
    %2227 = vmatprep.subr.mxu0 0.0
    %2228 = vmatpush2.msra.mxu0 0.0
    %2229 = vmatprep.subr.mxu0 0.0
    %2230 = vmatpush2.msra.mxu0 0.0
    %2231 = vmatprep.mubr.f32.mxu0 0.0
    %2232 = vmatmul.mubr.f32.gmra.mxu0 %v2120
    %v2233 = vpop.f32.mrf.mxu0
    %v2234 = vadd.f32 %v2117, %v2233
    %v2235 = vpop.f32.mrf.mxu0
    %2236 = vmatprep.mubr.f32.mxu0 0.0
    %2237 = vmatmul.mubr.f32.gmra.mxu0 %v2123
    %v2238 = vpop.f32.mrf.mxu0
    %v2239 = vadd.f32 %v2117, %v2238
    %v2240 = vpop.f32.mrf.mxu0
    %2241 = vmatprep.mubr.f32.mxu0 0.0
    %2242 = vmatmul.mubr.f32.gmra.mxu0 %v2126
    %v2243 = vpop.f32.mrf.mxu0
    %v2244 = vadd.f32 %v2117, %v2243
    %v2245 = vpop.f32.mrf.mxu0
    %2246 = vmatprep.mubr.f32.mxu0 0.0
    %2247 = vmatmul.mubr.f32.gmra.mxu0 %v2129
    %v2248 = vpop.f32.mrf.mxu0
    %v2249 = vadd.f32 %v2117, %v2248
    %v2250 = vpop.f32.mrf.mxu0
    %2251 = vmatprep.mubr.f32.mxu0 0.0
    %2252 = vmatmul.mubr.f32.gmra.mxu0 %v2132
    %v2253 = vpop.f32.mrf.mxu0
    %v2254 = vadd.f32 %v2117, %v2253
    %v2255 = vpop.f32.mrf.mxu0
    %2256 = vmatprep.mubr.f32.mxu0 0.0
    %2257 = vmatmul.mubr.f32.gmra.mxu0 %v2135
    %v2258 = vpop.f32.mrf.mxu0
    %v2259 = vadd.f32 %v2117, %v2258
    %v2260 = vpop.f32.mrf.mxu0
    %2261 = vmatprep.mubr.f32.mxu0 0.0
    %2262 = vmatmul.mubr.f32.gmra.mxu0 %v2138
    %v2263 = vpop.f32.mrf.mxu0
    %v2264 = vadd.f32 %v2117, %v2263
    %v2265 = vpop.f32.mrf.mxu0
    %2266 = vmatprep.mubr.f32.mxu0 0.0
    %2267 = vmatmul.mubr.f32.gmra.mxu0 %v2141
    %v2268 = vpop.f32.mrf.mxu0
    %v2269 = vadd.f32 %v2117, %v2268
    %v2270 = vpop.f32.mrf.mxu0
    %2271 = vmatprep.mubr.f32.mxu0 0.0
    %2272 = vmatmul.mubr.f32.gmra.mxu0 %v2144
    %v2273 = vpop.f32.mrf.mxu0
    %v2274 = vadd.f32 %v2117, %v2273
    %v2275 = vpop.f32.mrf.mxu0
    %2276 = vmatprep.mubr.f32.mxu0 0.0
    %2277 = vmatmul.mubr.f32.gmra.mxu0 %v2147
    %v2278 = vpop.f32.mrf.mxu0
    %v2279 = vadd.f32 %v2117, %v2278
    %v2280 = vpop.f32.mrf.mxu0
    %2281 = vmatprep.mubr.f32.mxu0 0.0
    %2282 = vmatmul.mubr.f32.gmra.mxu0 %v2150
    %v2283 = vpop.f32.mrf.mxu0
    %v2284 = vadd.f32 %v2117, %v2283
    %v2285 = vpop.f32.mrf.mxu0
    %2286 = vmatprep.mubr.f32.mxu0 0.0
    %2287 = vmatmul.mubr.f32.gmra.mxu0 %v2153
    %v2288 = vpop.f32.mrf.mxu0
    %v2289 = vadd.f32 %v2117, %v2288
    %v2290 = vpop.f32.mrf.mxu0
    %2291 = vmatprep.mubr.f32.mxu0 0.0
    %2292 = vmatmul.mubr.f32.gmra.mxu0 %v2156
    %v2293 = vpop.f32.mrf.mxu0
    %v2294 = vadd.f32 %v2117, %v2293
    %v2295 = vpop.f32.mrf.mxu0
    %2296 = vmatprep.mubr.f32.mxu0 0.0
    %2297 = vmatmul.mubr.f32.gmra.mxu0 %v2159
    %v2298 = vpop.f32.mrf.mxu0
    %v2299 = vadd.f32 %v2117, %v2298
    %v2300 = vpop.f32.mrf.mxu0
    %2301 = vmatprep.mubr.f32.mxu0 0.0
    %2302 = vmatmul.mubr.f32.gmra.mxu0 %v2162
    %v2303 = vpop.f32.mrf.mxu0
    %v2304 = vadd.f32 %v2117, %v2303
    %v2305 = vpop.f32.mrf.mxu0
    %2306 = vmatprep.mubr.f32.mxu0 0.0
    %2307 = vmatmul.mubr.f32.gmra.mxu0 %v2165
    %v2308 = vpop.f32.mrf.mxu0
    %v2309 = vadd.f32 %v2117, %v2308
    %v2310 = vpop.f32.mrf.mxu0
    %2311 = vdwg.mxu0
    %v2312 = vmul.f32 %v2234, 0.01
    %v2313 = vmul.f32 %v2239, 0.01
    %v2314 = vmul.f32 %v2244, 0.01
    %v2315 = vmul.f32 %v2249, 0.01
    %v2316 = vmul.f32 %v2254, 0.01
    %v2317 = vmul.f32 %v2259, 0.01
    %v2318 = vmul.f32 %v2264, 0.01
    %v2319 = vmul.f32 %v2269, 0.01
    %v2320 = vmul.f32 %v2274, 0.01
    %v2321 = vmul.f32 %v2279, 0.01
    %v2322 = vmul.f32 %v2284, 0.01
    %v2323 = vmul.f32 %v2289, 0.01
    %v2324 = vmul.f32 %v2294, 0.01
    %v2325 = vmul.f32 %v2299, 0.01
    %v2326 = vmul.f32 %v2304, 0.01
    %v2327 = vmul.f32 %v2309, 0.01
    %v2328 = vmax.f32 %v2234, %v2312
    %v2329 = vmax.f32 %v2239, %v2313
    %v2330 = vmax.f32 %v2244, %v2314
    %v2331 = vmax.f32 %v2249, %v2315
    %v2332 = vmax.f32 %v2254, %v2316
    %v2333 = vmax.f32 %v2259, %v2317
    %v2334 = vmax.f32 %v2264, %v2318
    %v2335 = vmax.f32 %v2269, %v2319
    %v2336 = vmax.f32 %v2274, %v2320
    %v2337 = vmax.f32 %v2279, %v2321
    %v2338 = vmax.f32 %v2284, %v2322
    %v2339 = vmax.f32 %v2289, %v2323
    %v2340 = vmax.f32 %v2294, %v2324
    %v2341 = vmax.f32 %v2299, %v2325
    %v2342 = vmax.f32 %v2304, %v2326
    %v2343 = vmax.f32 %v2309, %v2327
    %v2344 = vld [vmem:[#allocation4] sm:$0xff]
    %v2345 = vld [vmem:[#allocation4 + $0x8] sm:$0xff]
    %v2346 = vld [vmem:[#allocation4 + $0x10] sm:$0xff]
    %v2347 = vld [vmem:[#allocation4 + $0x18] sm:$0xff]
    %v2348 = vld [vmem:[#allocation4 + $0x20] sm:$0xff]
    %v2349 = vld [vmem:[#allocation4 + $0x28] sm:$0xff]
    %v2350 = vld [vmem:[#allocation4 + $0x30] sm:$0xff]
    %v2351 = vld [vmem:[#allocation4 + $0x38] sm:$0xff]
    %v2352 = vld [vmem:[#allocation4 + $0x40] sm:$0xff]
    %v2353 = vld [vmem:[#allocation4 + $0x48] sm:$0xff]
    %v2354 = vld [vmem:[#allocation4 + $0x50] sm:$0xff]
    %v2355 = vld [vmem:[#allocation4 + $0x58] sm:$0xff]
    %v2356 = vlaneseq
    %v2357 = vshrl.u32 %v2356, 7
    %v2358 = vsub.s32 0, %v2357
    %v2359 = vrot.slane %v71, %v2358
    %vm2360 = vcmask 785408
    %v2362 = vsel %vm2360, %v2328, 0
    %v2365 = vsel %vm2360, %v2329, 0
    %v2368 = vsel %vm2360, %v2330, 0
    %v2371 = vsel %vm2360, %v2331, 0
    %v2374 = vsel %vm2360, %v2332, 0
    %v2377 = vsel %vm2360, %v2333, 0
    %v2380 = vsel %vm2360, %v2334, 0
    %v2383 = vsel %vm2360, %v2335, 0
    %v2386 = vsel %vm2360, %v2336, 0
    %v2389 = vsel %vm2360, %v2337, 0
    %v2392 = vsel %vm2360, %v2338, 0
    %v2395 = vsel %vm2360, %v2339, 0
    %v2398 = vsel %vm2360, %v2340, 0
    %v2401 = vsel %vm2360, %v2341, 0
    %v2404 = vsel %vm2360, %v2342, 0
    %v2407 = vsel %vm2360, %v2343, 0
    %2409 = vmatprep.subr.mxu0 0.0
    %2410 = vmatpush1.msra.mxu0 0.0
    %2411 = vmatprep.subr.mxu0 0.0
    %2412 = vmatpush1.msra.mxu0 0.0
    %2413 = vmatprep.subr.mxu0 0.0
    %2414 = vmatpush1.msra.mxu0 0.0
    %2415 = vmatprep.subr.mxu0 0.0
    %2416 = vmatpush1.msra.mxu0 0.0
    %2417 = vmatprep.subr.mxu0 0.0
    %2418 = vmatpush1.msra.mxu0 %v2355
    %2419 = vmatprep.subr.mxu0 0.0
    %2420 = vmatpush1.msra.mxu0 %v2354
    %2421 = vmatprep.subr.mxu0 0.0
    %2422 = vmatpush1.msra.mxu0 %v2353
    %2423 = vmatprep.subr.mxu0 0.0
    %2424 = vmatpush1.msra.mxu0 %v2352
    %2425 = vmatprep.subr.mxu0 0.0
    %2426 = vmatpush1.msra.mxu0 %v2351
    %2427 = vmatprep.subr.mxu0 0.0
    %2428 = vmatpush1.msra.mxu0 %v2350
    %2429 = vmatprep.subr.mxu0 0.0
    %2430 = vmatpush1.msra.mxu0 %v2349
    %2431 = vmatprep.subr.mxu0 0.0
    %2432 = vmatpush1.msra.mxu0 %v2348
    %2433 = vmatprep.subr.mxu0 0.0
    %2434 = vmatpush1.msra.mxu0 %v2347
    %2435 = vmatprep.subr.mxu0 0.0
    %2436 = vmatpush1.msra.mxu0 %v2346
    %2437 = vmatprep.subr.mxu0 0.0
    %2438 = vmatpush1.msra.mxu0 %v2345
    %2439 = vmatprep.subr.mxu0 0.0
    %2440 = vmatpush1.msra.mxu0 %v2344
    %2441 = vmatprep.subr.mxu0 0.0
    %2442 = vmatpush2.msra.mxu0 0.0
    %2443 = vmatprep.subr.mxu0 0.0
    %2444 = vmatpush2.msra.mxu0 0.0
    %2445 = vmatprep.subr.mxu0 0.0
    %2446 = vmatpush2.msra.mxu0 0.0
    %2447 = vmatprep.subr.mxu0 0.0
    %2448 = vmatpush2.msra.mxu0 0.0
    %2449 = vmatprep.subr.mxu0 0.0
    %2450 = vmatpush2.msra.mxu0 0.0
    %2451 = vmatprep.subr.mxu0 0.0
    %2452 = vmatpush2.msra.mxu0 0.0
    %2453 = vmatprep.subr.mxu0 0.0
    %2454 = vmatpush2.msra.mxu0 0.0
    %2455 = vmatprep.subr.mxu0 0.0
    %2456 = vmatpush2.msra.mxu0 0.0
    %2457 = vmatprep.subr.mxu0 0.0
    %2458 = vmatpush2.msra.mxu0 0.0
    %2459 = vmatprep.subr.mxu0 0.0
    %2460 = vmatpush2.msra.mxu0 0.0
    %2461 = vmatprep.subr.mxu0 0.0
    %2462 = vmatpush2.msra.mxu0 0.0
    %2463 = vmatprep.subr.mxu0 0.0
    %2464 = vmatpush2.msra.mxu0 0.0
    %2465 = vmatprep.subr.mxu0 0.0
    %2466 = vmatpush2.msra.mxu0 0.0
    %2467 = vmatprep.subr.mxu0 0.0
    %2468 = vmatpush2.msra.mxu0 0.0
    %2469 = vmatprep.subr.mxu0 0.0
    %2470 = vmatpush2.msra.mxu0 0.0
    %2471 = vmatprep.subr.mxu0 0.0
    %2472 = vmatpush2.msra.mxu0 0.0
    %2473 = vmatprep.mubr.f32.mxu0 0.0
    %2474 = vmatmul.mubr.f32.gmra.mxu0 %v2362
    %v2475 = vpop.f32.mrf.mxu0
    %v2476 = vadd.f32 %v2359, %v2475
    %v2477 = vpop.f32.mrf.mxu0
    %2478 = vmatprep.mubr.f32.mxu0 0.0
    %2479 = vmatmul.mubr.f32.gmra.mxu0 %v2365
    %v2480 = vpop.f32.mrf.mxu0
    %v2481 = vadd.f32 %v2359, %v2480
    %v2482 = vpop.f32.mrf.mxu0
    %2483 = vmatprep.mubr.f32.mxu0 0.0
    %2484 = vmatmul.mubr.f32.gmra.mxu0 %v2368
    %v2485 = vpop.f32.mrf.mxu0
    %v2486 = vadd.f32 %v2359, %v2485
    %v2487 = vpop.f32.mrf.mxu0
    %2488 = vmatprep.mubr.f32.mxu0 0.0
    %2489 = vmatmul.mubr.f32.gmra.mxu0 %v2371
    %v2490 = vpop.f32.mrf.mxu0
    %v2491 = vadd.f32 %v2359, %v2490
    %v2492 = vpop.f32.mrf.mxu0
    %2493 = vmatprep.mubr.f32.mxu0 0.0
    %2494 = vmatmul.mubr.f32.gmra.mxu0 %v2374
    %v2495 = vpop.f32.mrf.mxu0
    %v2496 = vadd.f32 %v2359, %v2495
    %v2497 = vpop.f32.mrf.mxu0
    %2498 = vmatprep.mubr.f32.mxu0 0.0
    %2499 = vmatmul.mubr.f32.gmra.mxu0 %v2377
    %v2500 = vpop.f32.mrf.mxu0
    %v2501 = vadd.f32 %v2359, %v2500
    %v2502 = vpop.f32.mrf.mxu0
    %2503 = vmatprep.mubr.f32.mxu0 0.0
    %2504 = vmatmul.mubr.f32.gmra.mxu0 %v2380
    %v2505 = vpop.f32.mrf.mxu0
    %v2506 = vadd.f32 %v2359, %v2505
    %v2507 = vpop.f32.mrf.mxu0
    %2508 = vmatprep.mubr.f32.mxu0 0.0
    %2509 = vmatmul.mubr.f32.gmra.mxu0 %v2383
    %v2510 = vpop.f32.mrf.mxu0
    %v2511 = vadd.f32 %v2359, %v2510
    %v2512 = vpop.f32.mrf.mxu0
    %2513 = vmatprep.mubr.f32.mxu0 0.0
    %2514 = vmatmul.mubr.f32.gmra.mxu0 %v2386
    %v2515 = vpop.f32.mrf.mxu0
    %v2516 = vadd.f32 %v2359, %v2515
    %v2517 = vpop.f32.mrf.mxu0
    %2518 = vmatprep.mubr.f32.mxu0 0.0
    %2519 = vmatmul.mubr.f32.gmra.mxu0 %v2389
    %v2520 = vpop.f32.mrf.mxu0
    %v2521 = vadd.f32 %v2359, %v2520
    %v2522 = vpop.f32.mrf.mxu0
    %2523 = vmatprep.mubr.f32.mxu0 0.0
    %2524 = vmatmul.mubr.f32.gmra.mxu0 %v2392
    %v2525 = vpop.f32.mrf.mxu0
    %v2526 = vadd.f32 %v2359, %v2525
    %v2527 = vpop.f32.mrf.mxu0
    %2528 = vmatprep.mubr.f32.mxu0 0.0
    %2529 = vmatmul.mubr.f32.gmra.mxu0 %v2395
    %v2530 = vpop.f32.mrf.mxu0
    %v2531 = vadd.f32 %v2359, %v2530
    %v2532 = vpop.f32.mrf.mxu0
    %2533 = vmatprep.mubr.f32.mxu0 0.0
    %2534 = vmatmul.mubr.f32.gmra.mxu0 %v2398
    %v2535 = vpop.f32.mrf.mxu0
    %v2536 = vadd.f32 %v2359, %v2535
    %v2537 = vpop.f32.mrf.mxu0
    %2538 = vmatprep.mubr.f32.mxu0 0.0
    %2539 = vmatmul.mubr.f32.gmra.mxu0 %v2401
    %v2540 = vpop.f32.mrf.mxu0
    %v2541 = vadd.f32 %v2359, %v2540
    %v2542 = vpop.f32.mrf.mxu0
    %2543 = vmatprep.mubr.f32.mxu0 0.0
    %2544 = vmatmul.mubr.f32.gmra.mxu0 %v2404
    %v2545 = vpop.f32.mrf.mxu0
    %v2546 = vadd.f32 %v2359, %v2545
    %v2547 = vpop.f32.mrf.mxu0
    %2548 = vmatprep.mubr.f32.mxu0 0.0
    %2549 = vmatmul.mubr.f32.gmra.mxu0 %v2407
    %v2550 = vpop.f32.mrf.mxu0
    %v2551 = vadd.f32 %v2359, %v2550
    %v2552 = vpop.f32.mrf.mxu0
    %2553 = vdwg.mxu0
    %v2554 = vmul.f32 %v2476, 0.01
    %v2555 = vmul.f32 %v2481, 0.01
    %v2556 = vmul.f32 %v2486, 0.01
    %v2557 = vmul.f32 %v2491, 0.01
    %v2558 = vmul.f32 %v2496, 0.01
    %v2559 = vmul.f32 %v2501, 0.01
    %v2560 = vmul.f32 %v2506, 0.01
    %v2561 = vmul.f32 %v2511, 0.01
    %v2562 = vmul.f32 %v2516, 0.01
    %v2563 = vmul.f32 %v2521, 0.01
    %v2564 = vmul.f32 %v2526, 0.01
    %v2565 = vmul.f32 %v2531, 0.01
    %v2566 = vmul.f32 %v2536, 0.01
    %v2567 = vmul.f32 %v2541, 0.01
    %v2568 = vmul.f32 %v2546, 0.01
    %v2569 = vmul.f32 %v2551, 0.01
    %v2570 = vmax.f32 %v2476, %v2554
    %v2571 = vmax.f32 %v2481, %v2555
    %v2572 = vmax.f32 %v2486, %v2556
    %v2573 = vmax.f32 %v2491, %v2557
    %v2574 = vmax.f32 %v2496, %v2558
    %v2575 = vmax.f32 %v2501, %v2559
    %v2576 = vmax.f32 %v2506, %v2560
    %v2577 = vmax.f32 %v2511, %v2561
    %v2578 = vmax.f32 %v2516, %v2562
    %v2579 = vmax.f32 %v2521, %v2563
    %v2580 = vmax.f32 %v2526, %v2564
    %v2581 = vmax.f32 %v2531, %v2565
    %v2582 = vmax.f32 %v2536, %v2566
    %v2583 = vmax.f32 %v2541, %v2567
    %v2584 = vmax.f32 %v2546, %v2568
    %v2585 = vmax.f32 %v2551, %v2569
    %v2586 = vld [vmem:[%s5] sm:$0xff]
    %v2587 = vld [vmem:[%s5 + $0x8] sm:$0xff]
    %v2588 = vld [vmem:[%s5 + $0x10] sm:$0xff]
    %v2589 = vld [vmem:[%s5 + $0x18] sm:$0xff]
    %v2590 = vld [vmem:[%s5 + $0x20] sm:$0xff]
    %v2591 = vld [vmem:[%s5 + $0x28] sm:$0xff]
    %v2592 = vld [vmem:[%s5 + $0x30] sm:$0xff]
    %v2593 = vld [vmem:[%s5 + $0x38] sm:$0xff]
    %v2594 = vld [vmem:[%s5 + $0x40] sm:$0xff]
    %v2595 = vld [vmem:[%s5 + $0x48] sm:$0xff]
    %v2596 = vld [vmem:[%s5 + $0x50] sm:$0xff]
    %v2597 = vld [vmem:[%s5 + $0x58] sm:$0xff]
    %v2598 = vld [vmem:[%s5 + $0x60] sm:$0xff]
    %v2599 = vld [vmem:[%s5 + $0x68] sm:$0xff]
    %v2600 = vld [vmem:[%s5 + $0x70] sm:$0xff]
    %v2601 = vld [vmem:[%s5 + $0x78] sm:$0xff]
    %v2602 = vlaneseq
    %v2603 = vshrl.u32 %v2602, 7
    %v2604 = vsub.s32 0, %v2603
    %v2605 = vrot.slane %v72, %v2604
    %2606 = vmatprep.subr.mxu0 0.0
    %2607 = vmatpush1.msra.mxu0 %v2601
    %2608 = vmatprep.subr.mxu0 0.0
    %2609 = vmatpush1.msra.mxu0 %v2600
    %2610 = vmatprep.subr.mxu0 0.0
    %2611 = vmatpush1.msra.mxu0 %v2599
    %2612 = vmatprep.subr.mxu0 0.0
    %2613 = vmatpush1.msra.mxu0 %v2598
    %2614 = vmatprep.subr.mxu0 0.0
    %2615 = vmatpush1.msra.mxu0 %v2597
    %2616 = vmatprep.subr.mxu0 0.0
    %2617 = vmatpush1.msra.mxu0 %v2596
    %2618 = vmatprep.subr.mxu0 0.0
    %2619 = vmatpush1.msra.mxu0 %v2595
    %2620 = vmatprep.subr.mxu0 0.0
    %2621 = vmatpush1.msra.mxu0 %v2594
    %2622 = vmatprep.subr.mxu0 0.0
    %2623 = vmatpush1.msra.mxu0 %v2593
    %2624 = vmatprep.subr.mxu0 0.0
    %2625 = vmatpush1.msra.mxu0 %v2592
    %2626 = vmatprep.subr.mxu0 0.0
    %2627 = vmatpush1.msra.mxu0 %v2591
    %2628 = vmatprep.subr.mxu0 0.0
    %2629 = vmatpush1.msra.mxu0 %v2590
    %2630 = vmatprep.subr.mxu0 0.0
    %2631 = vmatpush1.msra.mxu0 %v2589
    %2632 = vmatprep.subr.mxu0 0.0
    %2633 = vmatpush1.msra.mxu0 %v2588
    %2634 = vmatprep.subr.mxu0 0.0
    %2635 = vmatpush1.msra.mxu0 %v2587
    %2636 = vmatprep.subr.mxu0 0.0
    %2637 = vmatpush1.msra.mxu0 %v2586
    %2638 = vmatprep.subr.mxu0 0.0
    %2639 = vmatpush2.msra.mxu0 0.0
    %2640 = vmatprep.subr.mxu0 0.0
    %2641 = vmatpush2.msra.mxu0 0.0
    %2642 = vmatprep.subr.mxu0 0.0
    %2643 = vmatpush2.msra.mxu0 0.0
    %2644 = vmatprep.subr.mxu0 0.0
    %2645 = vmatpush2.msra.mxu0 0.0
    %2646 = vmatprep.subr.mxu0 0.0
    %2647 = vmatpush2.msra.mxu0 0.0
    %2648 = vmatprep.subr.mxu0 0.0
    %2649 = vmatpush2.msra.mxu0 0.0
    %2650 = vmatprep.subr.mxu0 0.0
    %2651 = vmatpush2.msra.mxu0 0.0
    %2652 = vmatprep.subr.mxu0 0.0
    %2653 = vmatpush2.msra.mxu0 0.0
    %2654 = vmatprep.subr.mxu0 0.0
    %2655 = vmatpush2.msra.mxu0 0.0
    %2656 = vmatprep.subr.mxu0 0.0
    %2657 = vmatpush2.msra.mxu0 0.0
    %2658 = vmatprep.subr.mxu0 0.0
    %2659 = vmatpush2.msra.mxu0 0.0
    %2660 = vmatprep.subr.mxu0 0.0
    %2661 = vmatpush2.msra.mxu0 0.0
    %2662 = vmatprep.subr.mxu0 0.0
    %2663 = vmatpush2.msra.mxu0 0.0
    %2664 = vmatprep.subr.mxu0 0.0
    %2665 = vmatpush2.msra.mxu0 0.0
    %2666 = vmatprep.subr.mxu0 0.0
    %2667 = vmatpush2.msra.mxu0 0.0
    %2668 = vmatprep.subr.mxu0 0.0
    %2669 = vmatpush2.msra.mxu0 0.0
    %2670 = vmatprep.mubr.f32.mxu0 0.0
    %2671 = vmatmul.mubr.f32.gmra.mxu0 %v2570
    %v2672 = vpop.f32.mrf.mxu0
    %v2673 = vadd.f32 %v2605, %v2672
    %v2674 = vpop.f32.mrf.mxu0
    %2675 = vmatprep.mubr.f32.mxu0 0.0
    %2676 = vmatmul.mubr.f32.gmra.mxu0 %v2571
    %v2677 = vpop.f32.mrf.mxu0
    %v2678 = vadd.f32 %v2605, %v2677
    %v2679 = vpop.f32.mrf.mxu0
    %2680 = vmatprep.mubr.f32.mxu0 0.0
    %2681 = vmatmul.mubr.f32.gmra.mxu0 %v2572
    %v2682 = vpop.f32.mrf.mxu0
    %v2683 = vadd.f32 %v2605, %v2682
    %v2684 = vpop.f32.mrf.mxu0
    %2685 = vmatprep.mubr.f32.mxu0 0.0
    %2686 = vmatmul.mubr.f32.gmra.mxu0 %v2573
    %v2687 = vpop.f32.mrf.mxu0
    %v2688 = vadd.f32 %v2605, %v2687
    %v2689 = vpop.f32.mrf.mxu0
    %2690 = vmatprep.mubr.f32.mxu0 0.0
    %2691 = vmatmul.mubr.f32.gmra.mxu0 %v2574
    %v2692 = vpop.f32.mrf.mxu0
    %v2693 = vadd.f32 %v2605, %v2692
    %v2694 = vpop.f32.mrf.mxu0
    %2695 = vmatprep.mubr.f32.mxu0 0.0
    %2696 = vmatmul.mubr.f32.gmra.mxu0 %v2575
    %v2697 = vpop.f32.mrf.mxu0
    %v2698 = vadd.f32 %v2605, %v2697
    %v2699 = vpop.f32.mrf.mxu0
    %2700 = vmatprep.mubr.f32.mxu0 0.0
    %2701 = vmatmul.mubr.f32.gmra.mxu0 %v2576
    %v2702 = vpop.f32.mrf.mxu0
    %v2703 = vadd.f32 %v2605, %v2702
    %v2704 = vpop.f32.mrf.mxu0
    %2705 = vmatprep.mubr.f32.mxu0 0.0
    %2706 = vmatmul.mubr.f32.gmra.mxu0 %v2577
    %v2707 = vpop.f32.mrf.mxu0
    %v2708 = vadd.f32 %v2605, %v2707
    %v2709 = vpop.f32.mrf.mxu0
    %2710 = vmatprep.mubr.f32.mxu0 0.0
    %2711 = vmatmul.mubr.f32.gmra.mxu0 %v2578
    %v2712 = vpop.f32.mrf.mxu0
    %v2713 = vadd.f32 %v2605, %v2712
    %v2714 = vpop.f32.mrf.mxu0
    %2715 = vmatprep.mubr.f32.mxu0 0.0
    %2716 = vmatmul.mubr.f32.gmra.mxu0 %v2579
    %v2717 = vpop.f32.mrf.mxu0
    %v2718 = vadd.f32 %v2605, %v2717
    %v2719 = vpop.f32.mrf.mxu0
    %2720 = vmatprep.mubr.f32.mxu0 0.0
    %2721 = vmatmul.mubr.f32.gmra.mxu0 %v2580
    %v2722 = vpop.f32.mrf.mxu0
    %v2723 = vadd.f32 %v2605, %v2722
    %v2724 = vpop.f32.mrf.mxu0
    %2725 = vmatprep.mubr.f32.mxu0 0.0
    %2726 = vmatmul.mubr.f32.gmra.mxu0 %v2581
    %v2727 = vpop.f32.mrf.mxu0
    %v2728 = vadd.f32 %v2605, %v2727
    %v2729 = vpop.f32.mrf.mxu0
    %2730 = vmatprep.mubr.f32.mxu0 0.0
    %2731 = vmatmul.mubr.f32.gmra.mxu0 %v2582
    %v2732 = vpop.f32.mrf.mxu0
    %v2733 = vadd.f32 %v2605, %v2732
    %v2734 = vpop.f32.mrf.mxu0
    %2735 = vmatprep.mubr.f32.mxu0 0.0
    %2736 = vmatmul.mubr.f32.gmra.mxu0 %v2583
    %v2737 = vpop.f32.mrf.mxu0
    %v2738 = vadd.f32 %v2605, %v2737
    %v2739 = vpop.f32.mrf.mxu0
    %2740 = vmatprep.mubr.f32.mxu0 0.0
    %2741 = vmatmul.mubr.f32.gmra.mxu0 %v2584
    %v2742 = vpop.f32.mrf.mxu0
    %v2743 = vadd.f32 %v2605, %v2742
    %v2744 = vpop.f32.mrf.mxu0
    %2745 = vmatprep.mubr.f32.mxu0 0.0
    %2746 = vmatmul.mubr.f32.gmra.mxu0 %v2585
    %v2747 = vpop.f32.mrf.mxu0
    %v2748 = vadd.f32 %v2605, %v2747
    %v2749 = vpop.f32.mrf.mxu0
    %2750 = vdwg.mxu0
    %v2751 = vmul.f32 %v2673, 0.01
    %v2752 = vmul.f32 %v2678, 0.01
    %v2753 = vmul.f32 %v2683, 0.01
    %v2754 = vmul.f32 %v2688, 0.01
    %v2755 = vmul.f32 %v2693, 0.01
    %v2756 = vmul.f32 %v2698, 0.01
    %v2757 = vmul.f32 %v2703, 0.01
    %v2758 = vmul.f32 %v2708, 0.01
    %v2759 = vmul.f32 %v2713, 0.01
    %v2760 = vmul.f32 %v2718, 0.01
    %v2761 = vmul.f32 %v2723, 0.01
    %v2762 = vmul.f32 %v2728, 0.01
    %v2763 = vmul.f32 %v2733, 0.01
    %v2764 = vmul.f32 %v2738, 0.01
    %v2765 = vmul.f32 %v2743, 0.01
    %v2766 = vmul.f32 %v2748, 0.01
    %v2767 = vmax.f32 %v2673, %v2751
    %v2768 = vmax.f32 %v2678, %v2752
    %v2769 = vmax.f32 %v2683, %v2753
    %v2770 = vmax.f32 %v2688, %v2754
    %v2771 = vmax.f32 %v2693, %v2755
    %v2772 = vmax.f32 %v2698, %v2756
    %v2773 = vmax.f32 %v2703, %v2757
    %v2774 = vmax.f32 %v2708, %v2758
    %v2775 = vmax.f32 %v2713, %v2759
    %v2776 = vmax.f32 %v2718, %v2760
    %v2777 = vmax.f32 %v2723, %v2761
    %v2778 = vmax.f32 %v2728, %v2762
    %v2779 = vmax.f32 %v2733, %v2763
    %v2780 = vmax.f32 %v2738, %v2764
    %v2781 = vmax.f32 %v2743, %v2765
    %v2782 = vmax.f32 %v2748, %v2766
    %v2783 = vlaneseq
    %v2784 = vshrl.u32 %v2783, 7
    %v2785 = vsub.s32 0, %v2784
    %v2786 = vrot.slane %v73, %v2785
    %v2787 = vmul.f32 %v2767, %v2786
    %v2788 = vmul.f32 %v2768, %v2786
    %v2789 = vmul.f32 %v2769, %v2786
    %v2790 = vmul.f32 %v2770, %v2786
    %v2791 = vmul.f32 %v2771, %v2786
    %v2792 = vmul.f32 %v2772, %v2786
    %v2793 = vmul.f32 %v2773, %v2786
    %v2794 = vmul.f32 %v2774, %v2786
    %v2795 = vmul.f32 %v2775, %v2786
    %v2796 = vmul.f32 %v2776, %v2786
    %v2797 = vmul.f32 %v2777, %v2786
    %v2798 = vmul.f32 %v2778, %v2786
    %v2799 = vmul.f32 %v2779, %v2786
    %v2800 = vmul.f32 %v2780, %v2786
    %v2801 = vmul.f32 %v2781, %v2786
    %v2802 = vmul.f32 %v2782, %v2786
    %2803 = vadd.xlane.f32.xlu0 %v2787
    %v2804 = vpop.xlane.xlu0 %2803
    %2805 = vadd.xlane.f32.xlu0 %v2788
    %v2806 = vpop.xlane.xlu0 %2805
    %2807 = vadd.xlane.f32.xlu0 %v2789
    %v2808 = vpop.xlane.xlu0 %2807
    %2809 = vadd.xlane.f32.xlu0 %v2790
    %v2810 = vpop.xlane.xlu0 %2809
    %2811 = vadd.xlane.f32.xlu0 %v2791
    %v2812 = vpop.xlane.xlu0 %2811
    %2813 = vadd.xlane.f32.xlu0 %v2792
    %v2814 = vpop.xlane.xlu0 %2813
    %2815 = vadd.xlane.f32.xlu0 %v2793
    %v2816 = vpop.xlane.xlu0 %2815
    %2817 = vadd.xlane.f32.xlu0 %v2794
    %v2818 = vpop.xlane.xlu0 %2817
    %2819 = vadd.xlane.f32.xlu0 %v2795
    %v2820 = vpop.xlane.xlu0 %2819
    %2821 = vadd.xlane.f32.xlu0 %v2796
    %v2822 = vpop.xlane.xlu0 %2821
    %2823 = vadd.xlane.f32.xlu0 %v2797
    %v2824 = vpop.xlane.xlu0 %2823
    %2825 = vadd.xlane.f32.xlu0 %v2798
    %v2826 = vpop.xlane.xlu0 %2825
    %2827 = vadd.xlane.f32.xlu0 %v2799
    %v2828 = vpop.xlane.xlu0 %2827
    %2829 = vadd.xlane.f32.xlu0 %v2800
    %v2830 = vpop.xlane.xlu0 %2829
    %2831 = vadd.xlane.f32.xlu0 %v2801
    %v2832 = vpop.xlane.xlu0 %2831
    %2833 = vadd.xlane.f32.xlu0 %v2802
    %v2834 = vpop.xlane.xlu0 %2833
    %v2835 = vlaneseq
    %v2836 = vshrl.u32 %v2835, 7
    %v2837 = vsub.s32 0, %v2836
    %v2838 = vrot.slane %v74, %v2837
    %v2839 = vadd.f32 %v2804, %v2838
    %v2840 = vadd.f32 %v2806, %v2838
    %v2841 = vadd.f32 %v2808, %v2838
    %v2842 = vadd.f32 %v2810, %v2838
    %v2843 = vadd.f32 %v2812, %v2838
    %v2844 = vadd.f32 %v2814, %v2838
    %v2845 = vadd.f32 %v2816, %v2838
    %v2846 = vadd.f32 %v2818, %v2838
    %v2847 = vadd.f32 %v2820, %v2838
    %v2848 = vadd.f32 %v2822, %v2838
    %v2849 = vadd.f32 %v2824, %v2838
    %v2850 = vadd.f32 %v2826, %v2838
    %v2851 = vadd.f32 %v2828, %v2838
    %v2852 = vadd.f32 %v2830, %v2838
    %v2853 = vadd.f32 %v2832, %v2838
    %v2854 = vadd.f32 %v2834, %v2838
    %v2855 = vmul.f32 %v51, 6.437752
    %v2856 = vmul.f32 %v52, 6.437752
    %v2857 = vmul.f32 %v53, 6.437752
    %v2858 = vmul.f32 %v54, 6.437752
    %v2859 = vmul.f32 %v55, 6.437752
    %v2860 = vmul.f32 %v56, 6.437752
    %v2861 = vmul.f32 %v57, 6.437752
    %v2862 = vmul.f32 %v58, 6.437752
    %v2863 = vmul.f32 %v59, 6.437752
    %v2864 = vmul.f32 %v60, 6.437752
    %v2865 = vmul.f32 %v61, 6.437752
    %v2866 = vmul.f32 %v62, 6.437752
    %v2867 = vmul.f32 %v63, 6.437752
    %v2868 = vmul.f32 %v64, 6.437752
    %v2869 = vmul.f32 %v65, 6.437752
    %v2870 = vmul.f32 %v66, 6.437752
    %v2871 = vmul.f32 %v2855, 1.442695
    %v2872 = vpow.pop %v2871
    %v2873 = vmul.f32 %v2856, 1.442695
    %v2874 = vpow.pop %v2873
    %v2875 = vmul.f32 %v2857, 1.442695
    %v2876 = vpow.pop %v2875
    %v2877 = vmul.f32 %v2858, 1.442695
    %v2878 = vpow.pop %v2877
    %v2879 = vmul.f32 %v2859, 1.442695
    %v2880 = vpow.pop %v2879
    %v2881 = vmul.f32 %v2860, 1.442695
    %v2882 = vpow.pop %v2881
    %v2883 = vmul.f32 %v2861, 1.442695
    %v2884 = vpow.pop %v2883
    %v2885 = vmul.f32 %v2862, 1.442695
    %v2886 = vpow.pop %v2885
    %v2887 = vmul.f32 %v2863, 1.442695
    %v2888 = vpow.pop %v2887
    %v2889 = vmul.f32 %v2864, 1.442695
    %v2890 = vpow.pop %v2889
    %v2891 = vmul.f32 %v2865, 1.442695
    %v2892 = vpow.pop %v2891
    %v2893 = vmul.f32 %v2866, 1.442695
    %v2894 = vpow.pop %v2893
    %v2895 = vmul.f32 %v2867, 1.442695
    %v2896 = vpow.pop %v2895
    %v2897 = vmul.f32 %v2868, 1.442695
    %v2898 = vpow.pop %v2897
    %v2899 = vmul.f32 %v2869, 1.442695
    %v2900 = vpow.pop %v2899
    %v2901 = vmul.f32 %v2870, 1.442695
    %v2902 = vpow.pop %v2901
    %v2903 = vsub.f32 %v2872, 1.0
    %v2904 = vsub.f32 %v2874, 1.0
    %v2905 = vsub.f32 %v2876, 1.0
    %v2906 = vsub.f32 %v2878, 1.0
    %v2907 = vsub.f32 %v2880, 1.0
    %v2908 = vsub.f32 %v2882, 1.0
    %v2909 = vsub.f32 %v2884, 1.0
    %v2910 = vsub.f32 %v2886, 1.0
    %v2911 = vsub.f32 %v2888, 1.0
    %v2912 = vsub.f32 %v2890, 1.0
    %v2913 = vsub.f32 %v2892, 1.0
    %v2914 = vsub.f32 %v2894, 1.0
    %v2915 = vsub.f32 %v2896, 1.0
    %v2916 = vsub.f32 %v2898, 1.0
    %v2917 = vsub.f32 %v2900, 1.0
    %v2918 = vsub.f32 %v2902, 1.0
    %v2919 = vmul.f32 %v2903, 0.15533373
    %v2920 = vmul.f32 %v2904, 0.15533373
    %v2921 = vmul.f32 %v2905, 0.15533373
    %v2922 = vmul.f32 %v2906, 0.15533373
    %v2923 = vmul.f32 %v2907, 0.15533373
    %v2924 = vmul.f32 %v2908, 0.15533373
    %v2925 = vmul.f32 %v2909, 0.15533373
    %v2926 = vmul.f32 %v2910, 0.15533373
    %v2927 = vmul.f32 %v2911, 0.15533373
    %v2928 = vmul.f32 %v2912, 0.15533373
    %v2929 = vmul.f32 %v2913, 0.15533373
    %v2930 = vmul.f32 %v2914, 0.15533373
    %v2931 = vmul.f32 %v2915, 0.15533373
    %v2932 = vmul.f32 %v2916, 0.15533373
    %v2933 = vmul.f32 %v2917, 0.15533373
    %v2934 = vmul.f32 %v2918, 0.15533373
    %v2935 = vrsqrt.pop %v2919
    %v2936 = vrsqrt.pop %v2920
    %v2937 = vrsqrt.pop %v2921
    %v2938 = vrsqrt.pop %v2922
    %v2939 = vrsqrt.pop %v2923
    %v2940 = vrsqrt.pop %v2924
    %v2941 = vrsqrt.pop %v2925
    %v2942 = vrsqrt.pop %v2926
    %v2943 = vrsqrt.pop %v2927
    %v2944 = vrsqrt.pop %v2928
    %v2945 = vrsqrt.pop %v2929
    %v2946 = vrsqrt.pop %v2930
    %v2947 = vrsqrt.pop %v2931
    %v2948 = vrsqrt.pop %v2932
    %v2949 = vrsqrt.pop %v2933
    %v2950 = vrsqrt.pop %v2934
    %2967 = vrot.lane.b32.xlu0 %v2935, 110
    %v2968 = vpop.permute.xlu0 %2967
    %2969 = vrot.lane.b32.xlu0 %v2936, 110
    %v2970 = vpop.permute.xlu0 %2969
    %2971 = vrot.lane.b32.xlu0 %v2937, 110
    %v2972 = vpop.permute.xlu0 %2971
    %2973 = vrot.lane.b32.xlu0 %v2938, 110
    %v2974 = vpop.permute.xlu0 %2973
    %2975 = vrot.lane.b32.xlu0 %v2939, 110
    %v2976 = vpop.permute.xlu0 %2975
    %2977 = vrot.lane.b32.xlu0 %v2940, 110
    %v2978 = vpop.permute.xlu0 %2977
    %2979 = vrot.lane.b32.xlu0 %v2941, 110
    %v2980 = vpop.permute.xlu0 %2979
    %2981 = vrot.lane.b32.xlu0 %v2942, 110
    %v2982 = vpop.permute.xlu0 %2981
    %2983 = vrot.lane.b32.xlu0 %v2943, 110
    %v2984 = vpop.permute.xlu0 %2983
    %2985 = vrot.lane.b32.xlu0 %v2944, 110
    %v2986 = vpop.permute.xlu0 %2985
    %2987 = vrot.lane.b32.xlu0 %v2945, 110
    %v2988 = vpop.permute.xlu0 %2987
    %2989 = vrot.lane.b32.xlu0 %v2946, 110
    %v2990 = vpop.permute.xlu0 %2989
    %2991 = vrot.lane.b32.xlu0 %v2947, 110
    %v2992 = vpop.permute.xlu0 %2991
    %2993 = vrot.lane.b32.xlu0 %v2948, 110
    %v2994 = vpop.permute.xlu0 %2993
    %2995 = vrot.lane.b32.xlu0 %v2949, 110
    %v2996 = vpop.permute.xlu0 %2995
    %2997 = vrot.lane.b32.xlu0 %v2950, 110
    %v2998 = vpop.permute.xlu0 %2997
    %v3015 = vmul.f32 %v2839, %v2968
    %v3016 = vmul.f32 %v2840, %v2970
    %v3017 = vmul.f32 %v2841, %v2972
    %v3018 = vmul.f32 %v2842, %v2974
    %v3019 = vmul.f32 %v2843, %v2976
    %v3020 = vmul.f32 %v2844, %v2978
    %v3021 = vmul.f32 %v2845, %v2980
    %v3022 = vmul.f32 %v2846, %v2982
    %v3023 = vmul.f32 %v2847, %v2984
    %v3024 = vmul.f32 %v2848, %v2986
    %v3025 = vmul.f32 %v2849, %v2988
    %v3026 = vmul.f32 %v2850, %v2990
    %v3027 = vmul.f32 %v2851, %v2992
    %v3028 = vmul.f32 %v2852, %v2994
    %v3029 = vmul.f32 %v2853, %v2996
    %v3030 = vmul.f32 %v2854, %v2998
    %vm3031 = vcmask 7168
    %3032 = vst.msk [vmem:[%s6] sm:$0xff] %vm3031, %v3015
    %3033 = vst.msk [vmem:[%s6 + $0x8] sm:$0xff] %vm3031, %v3016
    %3034 = vst.msk [vmem:[%s6 + $0x10] sm:$0xff] %vm3031, %v3017
    %3035 = vst.msk [vmem:[%s6 + $0x18] sm:$0xff] %vm3031, %v3018
    %3036 = vst.msk [vmem:[%s6 + $0x20] sm:$0xff] %vm3031, %v3019
    %3037 = vst.msk [vmem:[%s6 + $0x28] sm:$0xff] %vm3031, %v3020
    %3038 = vst.msk [vmem:[%s6 + $0x30] sm:$0xff] %vm3031, %v3021
    %3039 = vst.msk [vmem:[%s6 + $0x38] sm:$0xff] %vm3031, %v3022
    %3040 = vst.msk [vmem:[%s6 + $0x40] sm:$0xff] %vm3031, %v3023
    %3041 = vst.msk [vmem:[%s6 + $0x48] sm:$0xff] %vm3031, %v3024
    %3042 = vst.msk [vmem:[%s6 + $0x50] sm:$0xff] %vm3031, %v3025
    %3043 = vst.msk [vmem:[%s6 + $0x58] sm:$0xff] %vm3031, %v3026
    %3044 = vst.msk [vmem:[%s6 + $0x60] sm:$0xff] %vm3031, %v3027
    %3045 = vst.msk [vmem:[%s6 + $0x68] sm:$0xff] %vm3031, %v3028
    %3046 = vst.msk [vmem:[%s6 + $0x70] sm:$0xff] %vm3031, %v3029
    %3047 = vst.msk [vmem:[%s6 + $0x78] sm:$0xff] %vm3031, %v3030
    // Predicated region
    $region34: #{tpu_custom_call.1} parent=1 // pred_check
      _
    $region35: #{tpu_custom_call.1} parent=1 // pred_check_branch
      %3049 = sbr.rel (0) target = $region37
    $region36: #{tpu_custom_call.1} parent=1 // pred_region
      _
    $region37: #{tpu_custom_call.1} parent=1 // pred_fallthru
      _
    // Predicated region
    $region38: #{tpu_custom_call.1} parent=1 // pred_check
      _
    $region39: #{tpu_custom_call.1} parent=1 // pred_check_branch
      %3051 = sbr.rel (0) target = $region41
    $region40: #{tpu_custom_call.1} parent=1 // pred_region
      _
    $region41: #{tpu_custom_call.1} parent=1 // pred_fallthru
      _
    %3052 = vsyncpa [#allocation3], 1
    %3053 = vsyncpa [#allocation5], 1

</llo_original>
